<compile_context>
chip_gen: v5e
topology: v5e:2x2
jax: 0.10.0
libtpu: 0.0.40
codegen_flags: <defaults>
</compile_context>

<pallas_src>
import jax
import jax.numpy as jnp
from jax.experimental import pallas as pl
from jax.experimental.pallas import tpu as pltpu

IMAGE_SIZE = 32
NUM_CLASSES = 10                       # stand-in for len(name_folders)

D_IN = IMAGE_SIZE * IMAGE_SIZE         # 1024
D_H1 = 4 * IMAGE_SIZE * IMAGE_SIZE     # 4096
D_H2 = 4 * NUM_CLASSES                 # 40
D_OUT = NUM_CLASSES                    # 10
D_PAD = 128                            # lane-padded output width

_HI = jax.lax.Precision.HIGHEST


def net_kernel(x_ref, wf_ref, bf_ref, o_ref):
    # Entire (activation-free) network == one GEMM + bias on the MXU.
    acc = jnp.dot(x_ref[...], wf_ref[...],
                  preferred_element_type=jnp.float32, precision=_HI)
    o_ref[...] = (acc + bf_ref[0:1, :]).astype(o_ref.dtype)


def fold_params(params):
    """One-time weight prep: fold fc1/fc2/fc3 into a single affine map and
    pad the output dim to 128 lanes (and bias to 8 sublanes). Exact because
    the module has no nonlinearities between the Linear layers."""
    w1, b1, w2, b2, w3, b3 = params
    wf = jnp.dot(jnp.dot(w1, w2, precision=_HI), w3, precision=_HI)      # (1024, 10)
    bf = jnp.dot(jnp.dot(b1, w2, precision=_HI) + b2, w3, precision=_HI) + b3
    wf_p = jnp.zeros((D_IN, D_PAD), jnp.float32).at[:, :D_OUT].set(wf)
    bf_p = jnp.zeros((8, D_PAD), jnp.float32).at[0:1, :D_OUT].set(bf)
    return wf_p, bf_p


def _round_up(x, m):
    return ((x + m - 1) // m) * m


def net_forward(x_nchw, folded_params):
    """x_nchw: (B, C, H, W) with C*H*W == IMAGE_SIZE*IMAGE_SIZE."""
    wf, bf = folded_params
    B = x_nchw.shape[0]
    # x.view(-1, IMAGE_SIZE*IMAGE_SIZE) — row-major flatten, same as torch.
    x2d = x_nchw.reshape(B, D_IN).astype(jnp.float32)

    # Batch tile: multiple of 8 sublanes, capped at 512 MXU rows; for B > 8
    # keep at least 2 grid steps so v7x's two TensorCores both get work.
    bm = min(512, _round_up(B, 8))
    if B > 8:
        bm = min(bm, _round_up(pl.cdiv(B, 2), 8))
    grid = (pl.cdiv(B, bm),)   # ragged last block handled by Pallas (masked)

    out = pl.pallas_call(
        net_kernel,
        out_shape=jax.ShapeDtypeStruct((B, D_PAD), jnp.float32),
        grid=grid,
        in_specs=[
            pl.BlockSpec((bm, D_IN), lambda i: (i, 0)),     # x tile (streamed)
            pl.BlockSpec((D_IN, D_PAD), lambda i: (0, 0)),  # folded weight (resident)
            pl.BlockSpec((8, D_PAD), lambda i: (0, 0)),     # folded bias (resident)
        ],
        out_specs=pl.BlockSpec((bm, D_PAD), lambda i: (i, 0)),
        compiler_params=pltpu.CompilerParams(
            dimension_semantics=("parallel",)),
    )(x2d, wf, bf)
    # Lane-trim back to NUM_CLASSES (B*128 -> B*10 copy). Consumers that can
    # take the lane-padded block may use `out` directly to skip this.
    return out[:, :D_OUT]


def init_params(key):
    """Deterministic init mimicking torch.nn.Linear (uniform ±1/sqrt(fan_in)).
    Weights stored as (in_features, out_features)."""
    ks = jax.random.split(key, 6)

    def linear(kw, kb, fan_in, fan_out):
        bound = 1.0 / jnp.sqrt(jnp.float32(fan_in))
        w = jax.random.uniform(kw, (fan_in, fan_out), jnp.float32, -bound, bound)
        b = jax.random.uniform(kb, (1, fan_out), jnp.float32, -bound, bound)
        return w, b

    w1, b1 = linear(ks[0], ks[1], D_IN, D_H1)
    w2, b2 = linear(ks[2], ks[3], D_H1, D_H2)
    w3, b3 = linear(ks[4], ks[5], D_H2, D_OUT)
    return (w1, b1, w2, b2, w3, b3)


def reference_forward(x_nchw, params):
    """Original per-layer forward (fc1 -> fc2 -> fc3) in plain JAX."""
    w1, b1, w2, b2, w3, b3 = params
    x2d = x_nchw.reshape(x_nchw.shape[0], D_IN).astype(jnp.float32)
    h1 = jnp.dot(x2d, w1, precision=_HI) + b1
    h2 = jnp.dot(h1, w2, precision=_HI) + b2
    return jnp.dot(h2, w3, precision=_HI) + b3


if __name__ == "__main__":
    key = jax.random.PRNGKey(0)
    k_x1, k_x2, k_p = jax.random.split(key, 3)

    params = init_params(k_p)
    folded = jax.block_until_ready(fold_params(params))   # one-time weight prep

    # Case 1: small batch, single grid step (grayscale NCHW 32x32 images).
    B1 = 8
    x1 = jax.random.normal(k_x1, (B1, 1, IMAGE_SIZE, IMAGE_SIZE), jnp.float32)
    out1 = jax.block_until_ready(net_forward(x1, folded))
    assert out1.shape == (B1, NUM_CLASSES), out1.shape
    ref1 = reference_forward(x1, params)
    assert jnp.allclose(out1, ref1, atol=2e-3, rtol=2e-3), (
        float(jnp.max(jnp.abs(out1 - ref1))))

    # Case 2: batch not a multiple of the tile -> exercises the 2-step
    # parallel grid and the ragged (masked) last block with no wrapper pad.
    B2 = 20
    x2 = jax.random.normal(k_x2, (B2, 1, IMAGE_SIZE, IMAGE_SIZE), jnp.float32)
    out2 = jax.block_until_ready(net_forward(x2, folded))
    assert out2.shape == (B2, NUM_CLASSES), out2.shape
    ref2 = reference_forward(x2, params)
    assert jnp.allclose(out2, ref2, atol=2e-3, rtol=2e-3), (
        float(jnp.max(jnp.abs(out2 - ref2))))

    print("KERNEL_OK")
</pallas_src>

<mosaic_0001>
module attributes {stable_mosaic.version = 11 : i64} {
  func.func @net_kernel(%arg0: i32, %arg1: memref<8x1024xf32, #tpu.memory_space<vmem>>, %arg2: memref<1024x128xf32, #tpu.memory_space<vmem>>, %arg3: memref<8x128xf32, #tpu.memory_space<vmem>>, %arg4: memref<8x128xf32, #tpu.memory_space<vmem>>) attributes {dimension_semantics = [#tpu.dimension_semantics<parallel>], iteration_bounds = array<i64: 1>, scalar_prefetch = 0 : i64, scratch_operands = 0 : i64, tpu.core_type = #tpu.core_type<tc>, window_params = [{transform_indices = @transform_0, window_bounds = array<i64: 8, 1024>}, {pipeline_mode = #tpu.pipeline_mode<synchronous>, transform_indices = @transform_1, window_bounds = array<i64: 1024, 128>}, {pipeline_mode = #tpu.pipeline_mode<synchronous>, transform_indices = @transform_2, window_bounds = array<i64: 8, 128>}, {transform_indices = @transform_3, window_bounds = array<i64: 8, 128>}]} {
    %c0 = arith.constant 0 : index
    %c0_0 = arith.constant 0 : index
    %0 = vector.load %arg1[%c0, %c0_0] : memref<8x1024xf32, #tpu.memory_space<vmem>>, vector<8x1024xf32>
    %c0_1 = arith.constant 0 : index
    %c0_2 = arith.constant 0 : index
    %1 = vector.load %arg2[%c0_1, %c0_2] : memref<1024x128xf32, #tpu.memory_space<vmem>>, vector<1024x128xf32>
    %cst = arith.constant dense<0.000000e+00> : vector<8x128xf32>
    %2 = tpu.matmul %0, %1, %cst {dimension_numbers = #tpu.dot_dimension_numbers<[1], [0], [0], [1], [0, 0, 1, 1], [], []>, precision = #tpu.contract_precision<fp32>} : vector<8x1024xf32>, vector<1024x128xf32>, vector<8x128xf32> -> vector<8x128xf32>
    %c0_3 = arith.constant 0 : index
    %c0_4 = arith.constant 0 : index
    %3 = vector.load %arg3[%c0_3, %c0_4] : memref<8x128xf32, #tpu.memory_space<vmem>>, vector<1x128xf32>
    %4 = vector.broadcast %3 : vector<1x128xf32> to vector<8x128xf32>
    %5 = arith.addf %2, %4 : vector<8x128xf32>
    %c0_5 = arith.constant 0 : index
    %c0_6 = arith.constant 0 : index
    %6 = vector.load %arg4[%c0_5, %c0_6] : memref<8x128xf32, #tpu.memory_space<vmem>>, vector<8x128xf32>
    tpu.vector_store %arg4[%c0_5, %c0_6], %5 {strides = array<i32>} : memref<8x128xf32, #tpu.memory_space<vmem>>, vector<8x128xf32>,
    return
  }
  func.func @transform_0(%arg0: i32) -> (i32, i32) {
    %c0_i32 = arith.constant 0 : i32
    %c0_i32_0 = arith.constant 0 : i32
    return %arg0, %c0_i32 : i32, i32
  }
  func.func @transform_1(%arg0: i32) -> (i32, i32) {
    %c0_i32 = arith.constant 0 : i32
    %c0_i32_0 = arith.constant 0 : i32
    %c0_i32_1 = arith.constant 0 : i32
    return %c0_i32, %c0_i32_0 : i32, i32
  }
  func.func @transform_2(%arg0: i32) -> (i32, i32) {
    %c0_i32 = arith.constant 0 : i32
    %c0_i32_0 = arith.constant 0 : i32
    %c0_i32_1 = arith.constant 0 : i32
    return %c0_i32, %c0_i32_0 : i32, i32
  }
  func.func @transform_3(%arg0: i32) -> (i32, i32) {
    %c0_i32 = arith.constant 0 : i32
    %c0_i32_0 = arith.constant 0 : i32
    return %arg0, %c0_i32 : i32, i32
  }
}

</mosaic_0001>

<llo_original>
// kernel: tpu_custom_call.1
$region0: #{tpu_custom_call.1}
  #allocation0 [shape = 'u32[]', space=smem, size = 0x4, offset = 0x4, fixed_abs, tag = 'smem constant byte address 0x4 - core index']
  #allocation1 [shape = 'u32[72,128]{1,0:T(1,128)}', space=vmem, size = 0x9000, scoped, tag = 'internal scratch']
  %s0 = inlined_call_operand.hbm [shape: f32[8,1024], index: 0, kind: input, shape index: {}]
  %s1 = inlined_call_operand.hbm [shape: f32[1024,128], index: 1, kind: input, shape index: {}]
  %s2 = inlined_call_operand.hbm [shape: f32[8,128], index: 2, kind: input, shape index: {}]
  %s3 = inlined_call_operand.hbm [shape: f32[8,128], index: 3, kind: output, shape index: {}]
  %s4 = sld [smem:[#allocation0]]
  $region34: #{tpu_custom_call.1} parent=0
    _
  %s6 = ssub.s32 1, %s4
  %s7 = scalar_select 0, %s6, %s4
  $region1: #{tpu_custom_call.1} parent=0
    #allocation2 [shape = 'u8[32768]{0}', space=vmem, size = 0x8000, scoped, tag = 'input window, operand 0, single buffered']
    #allocation3 [shape = 's32[1]{0}', space=sflag, size = 0x4, scoped, tag = 'scoped memory for tpu_custom_call.1']
    #allocation4 [shape = 's32[1]{0}', space=sflag, size = 0x4, scoped, tag = 'scoped memory for tpu_custom_call.1']
    #allocation5 [shape = 'u8[524288]{0}', space=vmem, size = 0x80000, scoped, tag = 'input window, operand 1, single buffered']
    #allocation6 [shape = 's32[1]{0}', space=sflag, size = 0x4, scoped, tag = 'scoped memory for tpu_custom_call.1']
    #allocation7 [shape = 'u8[4096]{0}', space=vmem, size = 0x1000, scoped, tag = 'input window, operand 2, single buffered']
    #allocation8 [shape = 'u8[4096]{0}', space=vmem, size = 0x1000, scoped, tag = 'output window, operand 0, single buffered']
    %8 = vsyncpa [#allocation3], 0
    %9 = vsyncpa [#allocation6], 0
    %10 = vsyncpa [#allocation4], 0
    // Predicated region
    $region2: #{tpu_custom_call.1} parent=1 // pred_check
      _
    $region3: #{tpu_custom_call.1} parent=1 // pred_check_branch
      %12 = sbr.rel (0) target = $region5
    $region4: #{tpu_custom_call.1} parent=1 // pred_region
      %14 = vsyncadd [#allocation3], 0
      %s16 = sshll.u32 %s0, 4
      %s17 = int_to_ptr.hbm [resolvable:$true] %s16
      %s18 = sshll.u32 [#allocation2], 4
      %s19 = int_to_ptr.vmem [resolvable:$true] %s18
      %21 = dma.hbm_to_vmem [thread:$0]  %s17, 1024, %s19, [#allocation3]
    $region5: #{tpu_custom_call.1} parent=1 // pred_fallthru
      _
    // Predicated region
    $region6: #{tpu_custom_call.1} parent=1 // pred_check
      _
    $region7: #{tpu_custom_call.1} parent=1 // pred_check_branch
      %23 = sbr.rel (0) target = $region9
    $region8: #{tpu_custom_call.1} parent=1 // pred_region
      %25 = vsyncadd [#allocation6], 0
      %s26 = sshll.u32 %s1, 4
      %s27 = int_to_ptr.hbm [resolvable:$true] %s26
      %s28 = sshll.u32 [#allocation5], 4
      %s29 = int_to_ptr.vmem [resolvable:$true] %s28
      %34 = dma.hbm_to_vmem [thread:$0]  %s27, 16384, %s29, [#allocation6], 128, 128, 8
    $region9: #{tpu_custom_call.1} parent=1 // pred_fallthru
      _
    // Predicated region
    $region10: #{tpu_custom_call.1} parent=1 // pred_check
      _
    $region11: #{tpu_custom_call.1} parent=1 // pred_check_branch
      %36 = sbr.rel (0) target = $region13
    $region12: #{tpu_custom_call.1} parent=1 // pred_region
      %38 = vsyncadd [#allocation6], 0
      %s40 = sshll.u32 %s2, 4
      %s41 = int_to_ptr.hbm [resolvable:$true] %s40
      %s42 = sshll.u32 [#allocation7], 4
      %s43 = int_to_ptr.vmem [resolvable:$true] %s42
      %45 = dma.hbm_to_vmem [thread:$0]  %s41, 128, %s43, [#allocation6]
    $region13: #{tpu_custom_call.1} parent=1 // pred_fallthru
      _
    // Predicated region
    $region14: #{tpu_custom_call.1} parent=1 // pred_check
      _
    $region15: #{tpu_custom_call.1} parent=1 // pred_check_branch
      %47 = sbr.rel (0) target = $region17
    $region16: #{tpu_custom_call.1} parent=1 // pred_region
      %49 = dma.done [#allocation3], 1024
    $region17: #{tpu_custom_call.1} parent=1 // pred_fallthru
      _
    // Predicated region
    $region18: #{tpu_custom_call.1} parent=1 // pred_check
      _
    $region19: #{tpu_custom_call.1} parent=1 // pred_check_branch
      %51 = sbr.rel (0) target = $region21
    $region20: #{tpu_custom_call.1} parent=1 // pred_region
      %53 = dma.done [#allocation6], 16384
    $region21: #{tpu_custom_call.1} parent=1 // pred_fallthru
      _
    // Predicated region
    $region22: #{tpu_custom_call.1} parent=1 // pred_check
      _
    $region23: #{tpu_custom_call.1} parent=1 // pred_check_branch
      %55 = sbr.rel (0) target = $region25
    $region24: #{tpu_custom_call.1} parent=1 // pred_region
      %57 = dma.done [#allocation6], 128
    $region25: #{tpu_custom_call.1} parent=1 // pred_fallthru
      _
    %v58 = vld [vmem:[#allocation2] sm:$0xff]
    %v59 = vld [vmem:[#allocation2 + $0x8] sm:$0xff]
    %v60 = vld [vmem:[#allocation2 + $0x10] sm:$0xff]
    %v61 = vld [vmem:[#allocation2 + $0x18] sm:$0xff]
    %v62 = vld [vmem:[#allocation2 + $0x20] sm:$0xff]
    %v63 = vld [vmem:[#allocation2 + $0x28] sm:$0xff]
    %v64 = vld [vmem:[#allocation2 + $0x30] sm:$0xff]
    %v65 = vld [vmem:[#allocation2 + $0x38] sm:$0xff]
    %v66 = vld [vmem:[#allocation5] sm:$0xff]
    %v67 = vld [vmem:[#allocation5 + $0x8] sm:$0xff]
    %v68 = vld [vmem:[#allocation5 + $0x10] sm:$0xff]
    %v69 = vld [vmem:[#allocation5 + $0x18] sm:$0xff]
    %v70 = vld [vmem:[#allocation5 + $0x20] sm:$0xff]
    %v71 = vld [vmem:[#allocation5 + $0x28] sm:$0xff]
    %v72 = vld [vmem:[#allocation5 + $0x30] sm:$0xff]
    %v73 = vld [vmem:[#allocation5 + $0x38] sm:$0xff]
    %v74 = vld [vmem:[#allocation5 + $0x40] sm:$0xff]
    %v75 = vld [vmem:[#allocation5 + $0x48] sm:$0xff]
    %v76 = vld [vmem:[#allocation5 + $0x50] sm:$0xff]
    %v77 = vld [vmem:[#allocation5 + $0x58] sm:$0xff]
    %v78 = vld [vmem:[#allocation5 + $0x60] sm:$0xff]
    %v79 = vld [vmem:[#allocation5 + $0x68] sm:$0xff]
    %v80 = vld [vmem:[#allocation5 + $0x70] sm:$0xff]
    %v81 = vld [vmem:[#allocation5 + $0x78] sm:$0xff]
    %v82 = vld [vmem:[#allocation5 + $0x80] sm:$0xff]
    %v83 = vld [vmem:[#allocation5 + $0x88] sm:$0xff]
    %v84 = vld [vmem:[#allocation5 + $0x90] sm:$0xff]
    %v85 = vld [vmem:[#allocation5 + $0x98] sm:$0xff]
    %v86 = vld [vmem:[#allocation5 + $0xa0] sm:$0xff]
    %v87 = vld [vmem:[#allocation5 + $0xa8] sm:$0xff]
    %v88 = vld [vmem:[#allocation5 + $0xb0] sm:$0xff]
    %v89 = vld [vmem:[#allocation5 + $0xb8] sm:$0xff]
    %v90 = vld [vmem:[#allocation5 + $0xc0] sm:$0xff]
    %v91 = vld [vmem:[#allocation5 + $0xc8] sm:$0xff]
    %v92 = vld [vmem:[#allocation5 + $0xd0] sm:$0xff]
    %v93 = vld [vmem:[#allocation5 + $0xd8] sm:$0xff]
    %v94 = vld [vmem:[#allocation5 + $0xe0] sm:$0xff]
    %v95 = vld [vmem:[#allocation5 + $0xe8] sm:$0xff]
    %v96 = vld [vmem:[#allocation5 + $0xf0] sm:$0xff]
    %v97 = vld [vmem:[#allocation5 + $0xf8] sm:$0xff]
    %v98 = vld [vmem:[#allocation5 + $0x100] sm:$0xff]
    %v99 = vld [vmem:[#allocation5 + $0x108] sm:$0xff]
    %v100 = vld [vmem:[#allocation5 + $0x110] sm:$0xff]
    %v101 = vld [vmem:[#allocation5 + $0x118] sm:$0xff]
    %v102 = vld [vmem:[#allocation5 + $0x120] sm:$0xff]
    %v103 = vld [vmem:[#allocation5 + $0x128] sm:$0xff]
    %v104 = vld [vmem:[#allocation5 + $0x130] sm:$0xff]
    %v105 = vld [vmem:[#allocation5 + $0x138] sm:$0xff]
    %v106 = vld [vmem:[#allocation5 + $0x140] sm:$0xff]
    %v107 = vld [vmem:[#allocation5 + $0x148] sm:$0xff]
    %v108 = vld [vmem:[#allocation5 + $0x150] sm:$0xff]
    %v109 = vld [vmem:[#allocation5 + $0x158] sm:$0xff]
    %v110 = vld [vmem:[#allocation5 + $0x160] sm:$0xff]
    %v111 = vld [vmem:[#allocation5 + $0x168] sm:$0xff]
    %v112 = vld [vmem:[#allocation5 + $0x170] sm:$0xff]
    %v113 = vld [vmem:[#allocation5 + $0x178] sm:$0xff]
    %v114 = vld [vmem:[#allocation5 + $0x180] sm:$0xff]
    %v115 = vld [vmem:[#allocation5 + $0x188] sm:$0xff]
    %v116 = vld [vmem:[#allocation5 + $0x190] sm:$0xff]
    %v117 = vld [vmem:[#allocation5 + $0x198] sm:$0xff]
    %v118 = vld [vmem:[#allocation5 + $0x1a0] sm:$0xff]
    %v119 = vld [vmem:[#allocation5 + $0x1a8] sm:$0xff]
    %v120 = vld [vmem:[#allocation5 + $0x1b0] sm:$0xff]
    %v121 = vld [vmem:[#allocation5 + $0x1b8] sm:$0xff]
    %v122 = vld [vmem:[#allocation5 + $0x1c0] sm:$0xff]
    %v123 = vld [vmem:[#allocation5 + $0x1c8] sm:$0xff]
    %v124 = vld [vmem:[#allocation5 + $0x1d0] sm:$0xff]
    %v125 = vld [vmem:[#allocation5 + $0x1d8] sm:$0xff]
    %v126 = vld [vmem:[#allocation5 + $0x1e0] sm:$0xff]
    %v127 = vld [vmem:[#allocation5 + $0x1e8] sm:$0xff]
    %v128 = vld [vmem:[#allocation5 + $0x1f0] sm:$0xff]
    %v129 = vld [vmem:[#allocation5 + $0x1f8] sm:$0xff]
    %v130 = vld [vmem:[#allocation5 + $0x200] sm:$0xff]
    %v131 = vld [vmem:[#allocation5 + $0x208] sm:$0xff]
    %v132 = vld [vmem:[#allocation5 + $0x210] sm:$0xff]
    %v133 = vld [vmem:[#allocation5 + $0x218] sm:$0xff]
    %v134 = vld [vmem:[#allocation5 + $0x220] sm:$0xff]
    %v135 = vld [vmem:[#allocation5 + $0x228] sm:$0xff]
    %v136 = vld [vmem:[#allocation5 + $0x230] sm:$0xff]
    %v137 = vld [vmem:[#allocation5 + $0x238] sm:$0xff]
    %v138 = vld [vmem:[#allocation5 + $0x240] sm:$0xff]
    %v139 = vld [vmem:[#allocation5 + $0x248] sm:$0xff]
    %v140 = vld [vmem:[#allocation5 + $0x250] sm:$0xff]
    %v141 = vld [vmem:[#allocation5 + $0x258] sm:$0xff]
    %v142 = vld [vmem:[#allocation5 + $0x260] sm:$0xff]
    %v143 = vld [vmem:[#allocation5 + $0x268] sm:$0xff]
    %v144 = vld [vmem:[#allocation5 + $0x270] sm:$0xff]
    %v145 = vld [vmem:[#allocation5 + $0x278] sm:$0xff]
    %v146 = vld [vmem:[#allocation5 + $0x280] sm:$0xff]
    %v147 = vld [vmem:[#allocation5 + $0x288] sm:$0xff]
    %v148 = vld [vmem:[#allocation5 + $0x290] sm:$0xff]
    %v149 = vld [vmem:[#allocation5 + $0x298] sm:$0xff]
    %v150 = vld [vmem:[#allocation5 + $0x2a0] sm:$0xff]
    %v151 = vld [vmem:[#allocation5 + $0x2a8] sm:$0xff]
    %v152 = vld [vmem:[#allocation5 + $0x2b0] sm:$0xff]
    %v153 = vld [vmem:[#allocation5 + $0x2b8] sm:$0xff]
    %v154 = vld [vmem:[#allocation5 + $0x2c0] sm:$0xff]
    %v155 = vld [vmem:[#allocation5 + $0x2c8] sm:$0xff]
    %v156 = vld [vmem:[#allocation5 + $0x2d0] sm:$0xff]
    %v157 = vld [vmem:[#allocation5 + $0x2d8] sm:$0xff]
    %v158 = vld [vmem:[#allocation5 + $0x2e0] sm:$0xff]
    %v159 = vld [vmem:[#allocation5 + $0x2e8] sm:$0xff]
    %v160 = vld [vmem:[#allocation5 + $0x2f0] sm:$0xff]
    %v161 = vld [vmem:[#allocation5 + $0x2f8] sm:$0xff]
    %v162 = vld [vmem:[#allocation5 + $0x300] sm:$0xff]
    %v163 = vld [vmem:[#allocation5 + $0x308] sm:$0xff]
    %v164 = vld [vmem:[#allocation5 + $0x310] sm:$0xff]
    %v165 = vld [vmem:[#allocation5 + $0x318] sm:$0xff]
    %v166 = vld [vmem:[#allocation5 + $0x320] sm:$0xff]
    %v167 = vld [vmem:[#allocation5 + $0x328] sm:$0xff]
    %v168 = vld [vmem:[#allocation5 + $0x330] sm:$0xff]
    %v169 = vld [vmem:[#allocation5 + $0x338] sm:$0xff]
    %v170 = vld [vmem:[#allocation5 + $0x340] sm:$0xff]
    %v171 = vld [vmem:[#allocation5 + $0x348] sm:$0xff]
    %v172 = vld [vmem:[#allocation5 + $0x350] sm:$0xff]
    %v173 = vld [vmem:[#allocation5 + $0x358] sm:$0xff]
    %v174 = vld [vmem:[#allocation5 + $0x360] sm:$0xff]
    %v175 = vld [vmem:[#allocation5 + $0x368] sm:$0xff]
    %v176 = vld [vmem:[#allocation5 + $0x370] sm:$0xff]
    %v177 = vld [vmem:[#allocation5 + $0x378] sm:$0xff]
    %v178 = vld [vmem:[#allocation5 + $0x380] sm:$0xff]
    %v179 = vld [vmem:[#allocation5 + $0x388] sm:$0xff]
    %v180 = vld [vmem:[#allocation5 + $0x390] sm:$0xff]
    %v181 = vld [vmem:[#allocation5 + $0x398] sm:$0xff]
    %v182 = vld [vmem:[#allocation5 + $0x3a0] sm:$0xff]
    %v183 = vld [vmem:[#allocation5 + $0x3a8] sm:$0xff]
    %v184 = vld [vmem:[#allocation5 + $0x3b0] sm:$0xff]
    %v185 = vld [vmem:[#allocation5 + $0x3b8] sm:$0xff]
    %v186 = vld [vmem:[#allocation5 + $0x3c0] sm:$0xff]
    %v187 = vld [vmem:[#allocation5 + $0x3c8] sm:$0xff]
    %v188 = vld [vmem:[#allocation5 + $0x3d0] sm:$0xff]
    %v189 = vld [vmem:[#allocation5 + $0x3d8] sm:$0xff]
    %v190 = vld [vmem:[#allocation5 + $0x3e0] sm:$0xff]
    %v191 = vld [vmem:[#allocation5 + $0x3e8] sm:$0xff]
    %v192 = vld [vmem:[#allocation5 + $0x3f0] sm:$0xff]
    %v193 = vld [vmem:[#allocation5 + $0x3f8] sm:$0xff]
    %v194 = vld [vmem:[#allocation7] sm:$0x1]
    %v195 = vperm.slane %v194, 0
    %v196 = vand.u32 %v81, 4294901760
    %197 = vmatpush.msra.mxu0 %v196
    %v198 = vand.u32 %v80, 4294901760
    %199 = vmatpush.msra.mxu0 %v198
    %v200 = vand.u32 %v79, 4294901760
    %201 = vmatpush.msra.mxu0 %v200
    %v202 = vand.u32 %v78, 4294901760
    %203 = vmatpush.msra.mxu0 %v202
    %v204 = vand.u32 %v77, 4294901760
    %205 = vmatpush.msra.mxu0 %v204
    %v206 = vand.u32 %v76, 4294901760
    %207 = vmatpush.msra.mxu0 %v206
    %v208 = vand.u32 %v75, 4294901760
    %209 = vmatpush.msra.mxu0 %v208
    %v210 = vand.u32 %v74, 4294901760
    %211 = vmatpush.msra.mxu0 %v210
    %v212 = vand.u32 %v73, 4294901760
    %213 = vmatpush.msra.mxu0 %v212
    %v214 = vand.u32 %v72, 4294901760
    %215 = vmatpush.msra.mxu0 %v214
    %v216 = vand.u32 %v71, 4294901760
    %217 = vmatpush.msra.mxu0 %v216
    %v218 = vand.u32 %v70, 4294901760
    %219 = vmatpush.msra.mxu0 %v218
    %v220 = vand.u32 %v69, 4294901760
    %221 = vmatpush.msra.mxu0 %v220
    %v222 = vand.u32 %v68, 4294901760
    %223 = vmatpush.msra.mxu0 %v222
    %v224 = vand.u32 %v67, 4294901760
    %225 = vmatpush.msra.mxu0 %v224
    %v226 = vand.u32 %v66, 4294901760
    %227 = vmatpush.msra.mxu0 %v226
    %v228 = vand.u32 %v58, 4294901760
    %v229 = vsub.f32 %v58, %v228
    %v230 = vand.u32 %v229, 4294901760
    %v231 = vsub.f32 %v229, %v230
    %v232 = vand.u32 %v231, 4294901760
    %233 = vmatmul.f32.gmra.mxu0 %v232
    %v234 = vpop.f32.mrf.mxu0
    %v235 = vadd.f32 %v195, %v234
    %236 = vdwg.mxu0
    %v237 = vand.u32 %v81, 4294901760
    %v238 = vsub.f32 %v81, %v237
    %v239 = vand.u32 %v238, 4294901760
    %v240 = vsub.f32 %v238, %v239
    %v241 = vand.u32 %v240, 4294901760
    %242 = vmatpush.msra.mxu0 %v241
    %v243 = vand.u32 %v80, 4294901760
    %v244 = vsub.f32 %v80, %v243
    %v245 = vand.u32 %v244, 4294901760
    %v246 = vsub.f32 %v244, %v245
    %v247 = vand.u32 %v246, 4294901760
    %248 = vmatpush.msra.mxu0 %v247
    %v249 = vand.u32 %v79, 4294901760
    %v250 = vsub.f32 %v79, %v249
    %v251 = vand.u32 %v250, 4294901760
    %v252 = vsub.f32 %v250, %v251
    %v253 = vand.u32 %v252, 4294901760
    %254 = vmatpush.msra.mxu0 %v253
    %v255 = vand.u32 %v78, 4294901760
    %v256 = vsub.f32 %v78, %v255
    %v257 = vand.u32 %v256, 4294901760
    %v258 = vsub.f32 %v256, %v257
    %v259 = vand.u32 %v258, 4294901760
    %260 = vmatpush.msra.mxu0 %v259
    %v261 = vand.u32 %v77, 4294901760
    %v262 = vsub.f32 %v77, %v261
    %v263 = vand.u32 %v262, 4294901760
    %v264 = vsub.f32 %v262, %v263
    %v265 = vand.u32 %v264, 4294901760
    %266 = vmatpush.msra.mxu0 %v265
    %v267 = vand.u32 %v76, 4294901760
    %v268 = vsub.f32 %v76, %v267
    %v269 = vand.u32 %v268, 4294901760
    %v270 = vsub.f32 %v268, %v269
    %v271 = vand.u32 %v270, 4294901760
    %272 = vmatpush.msra.mxu0 %v271
    %v273 = vand.u32 %v75, 4294901760
    %v274 = vsub.f32 %v75, %v273
    %v275 = vand.u32 %v274, 4294901760
    %v276 = vsub.f32 %v274, %v275
    %v277 = vand.u32 %v276, 4294901760
    %278 = vmatpush.msra.mxu0 %v277
    %v279 = vand.u32 %v74, 4294901760
    %v280 = vsub.f32 %v74, %v279
    %v281 = vand.u32 %v280, 4294901760
    %v282 = vsub.f32 %v280, %v281
    %v283 = vand.u32 %v282, 4294901760
    %284 = vmatpush.msra.mxu0 %v283
    %v285 = vand.u32 %v73, 4294901760
    %v286 = vsub.f32 %v73, %v285
    %v287 = vand.u32 %v286, 4294901760
    %v288 = vsub.f32 %v286, %v287
    %v289 = vand.u32 %v288, 4294901760
    %290 = vmatpush.msra.mxu0 %v289
    %v291 = vand.u32 %v72, 4294901760
    %v292 = vsub.f32 %v72, %v291
    %v293 = vand.u32 %v292, 4294901760
    %v294 = vsub.f32 %v292, %v293
    %v295 = vand.u32 %v294, 4294901760
    %296 = vmatpush.msra.mxu0 %v295
    %v297 = vand.u32 %v71, 4294901760
    %v298 = vsub.f32 %v71, %v297
    %v299 = vand.u32 %v298, 4294901760
    %v300 = vsub.f32 %v298, %v299
    %v301 = vand.u32 %v300, 4294901760
    %302 = vmatpush.msra.mxu0 %v301
    %v303 = vand.u32 %v70, 4294901760
    %v304 = vsub.f32 %v70, %v303
    %v305 = vand.u32 %v304, 4294901760
    %v306 = vsub.f32 %v304, %v305
    %v307 = vand.u32 %v306, 4294901760
    %308 = vmatpush.msra.mxu0 %v307
    %v309 = vand.u32 %v69, 4294901760
    %v310 = vsub.f32 %v69, %v309
    %v311 = vand.u32 %v310, 4294901760
    %v312 = vsub.f32 %v310, %v311
    %v313 = vand.u32 %v312, 4294901760
    %314 = vmatpush.msra.mxu0 %v313
    %v315 = vand.u32 %v68, 4294901760
    %v316 = vsub.f32 %v68, %v315
    %v317 = vand.u32 %v316, 4294901760
    %v318 = vsub.f32 %v316, %v317
    %v319 = vand.u32 %v318, 4294901760
    %320 = vmatpush.msra.mxu0 %v319
    %v321 = vand.u32 %v67, 4294901760
    %v322 = vsub.f32 %v67, %v321
    %v323 = vand.u32 %v322, 4294901760
    %v324 = vsub.f32 %v322, %v323
    %v325 = vand.u32 %v324, 4294901760
    %326 = vmatpush.msra.mxu0 %v325
    %v327 = vand.u32 %v66, 4294901760
    %v328 = vsub.f32 %v66, %v327
    %v329 = vand.u32 %v328, 4294901760
    %v330 = vsub.f32 %v328, %v329
    %v331 = vand.u32 %v330, 4294901760
    %332 = vmatpush.msra.mxu0 %v331
    %v333 = vand.u32 %v58, 4294901760
    %334 = vmatmul.f32.gmra.mxu0 %v333
    %v335 = vpop.f32.mrf.mxu0
    %v336 = vadd.f32 %v235, %v335
    %337 = vdwg.mxu0
    %v338 = vand.u32 %v81, 4294901760
    %v339 = vsub.f32 %v81, %v338
    %340 = vmatpush.msra.mxu0 %v339
    %v341 = vand.u32 %v80, 4294901760
    %v342 = vsub.f32 %v80, %v341
    %343 = vmatpush.msra.mxu0 %v342
    %v344 = vand.u32 %v79, 4294901760
    %v345 = vsub.f32 %v79, %v344
    %346 = vmatpush.msra.mxu0 %v345
    %v347 = vand.u32 %v78, 4294901760
    %v348 = vsub.f32 %v78, %v347
    %349 = vmatpush.msra.mxu0 %v348
    %v350 = vand.u32 %v77, 4294901760
    %v351 = vsub.f32 %v77, %v350
    %352 = vmatpush.msra.mxu0 %v351
    %v353 = vand.u32 %v76, 4294901760
    %v354 = vsub.f32 %v76, %v353
    %355 = vmatpush.msra.mxu0 %v354
    %v356 = vand.u32 %v75, 4294901760
    %v357 = vsub.f32 %v75, %v356
    %358 = vmatpush.msra.mxu0 %v357
    %v359 = vand.u32 %v74, 4294901760
    %v360 = vsub.f32 %v74, %v359
    %361 = vmatpush.msra.mxu0 %v360
    %v362 = vand.u32 %v73, 4294901760
    %v363 = vsub.f32 %v73, %v362
    %364 = vmatpush.msra.mxu0 %v363
    %v365 = vand.u32 %v72, 4294901760
    %v366 = vsub.f32 %v72, %v365
    %367 = vmatpush.msra.mxu0 %v366
    %v368 = vand.u32 %v71, 4294901760
    %v369 = vsub.f32 %v71, %v368
    %370 = vmatpush.msra.mxu0 %v369
    %v371 = vand.u32 %v70, 4294901760
    %v372 = vsub.f32 %v70, %v371
    %373 = vmatpush.msra.mxu0 %v372
    %v374 = vand.u32 %v69, 4294901760
    %v375 = vsub.f32 %v69, %v374
    %376 = vmatpush.msra.mxu0 %v375
    %v377 = vand.u32 %v68, 4294901760
    %v378 = vsub.f32 %v68, %v377
    %379 = vmatpush.msra.mxu0 %v378
    %v380 = vand.u32 %v67, 4294901760
    %v381 = vsub.f32 %v67, %v380
    %382 = vmatpush.msra.mxu0 %v381
    %v383 = vand.u32 %v66, 4294901760
    %v384 = vsub.f32 %v66, %v383
    %385 = vmatpush.msra.mxu0 %v384
    %v386 = vand.u32 %v58, 4294901760
    %v387 = vsub.f32 %v58, %v386
    %388 = vmatmul.f32.gmra.mxu0 %v387
    %v389 = vpop.f32.mrf.mxu0
    %v390 = vadd.f32 %v336, %v389
    %391 = vdwg.mxu0
    %v392 = vand.u32 %v81, 4294901760
    %393 = vmatpush.msra.mxu0 %v392
    %v394 = vand.u32 %v80, 4294901760
    %395 = vmatpush.msra.mxu0 %v394
    %v396 = vand.u32 %v79, 4294901760
    %397 = vmatpush.msra.mxu0 %v396
    %v398 = vand.u32 %v78, 4294901760
    %399 = vmatpush.msra.mxu0 %v398
    %v400 = vand.u32 %v77, 4294901760
    %401 = vmatpush.msra.mxu0 %v400
    %v402 = vand.u32 %v76, 4294901760
    %403 = vmatpush.msra.mxu0 %v402
    %v404 = vand.u32 %v75, 4294901760
    %405 = vmatpush.msra.mxu0 %v404
    %v406 = vand.u32 %v74, 4294901760
    %407 = vmatpush.msra.mxu0 %v406
    %v408 = vand.u32 %v73, 4294901760
    %409 = vmatpush.msra.mxu0 %v408
    %v410 = vand.u32 %v72, 4294901760
    %411 = vmatpush.msra.mxu0 %v410
    %v412 = vand.u32 %v71, 4294901760
    %413 = vmatpush.msra.mxu0 %v412
    %v414 = vand.u32 %v70, 4294901760
    %415 = vmatpush.msra.mxu0 %v414
    %v416 = vand.u32 %v69, 4294901760
    %417 = vmatpush.msra.mxu0 %v416
    %v418 = vand.u32 %v68, 4294901760
    %419 = vmatpush.msra.mxu0 %v418
    %v420 = vand.u32 %v67, 4294901760
    %421 = vmatpush.msra.mxu0 %v420
    %v422 = vand.u32 %v66, 4294901760
    %423 = vmatpush.msra.mxu0 %v422
    %v424 = vand.u32 %v58, 4294901760
    %v425 = vsub.f32 %v58, %v424
    %v426 = vand.u32 %v425, 4294901760
    %427 = vmatmul.f32.gmra.mxu0 %v426
    %v428 = vpop.f32.mrf.mxu0
    %v429 = vadd.f32 %v390, %v428
    %430 = vdwg.mxu0
    %v431 = vand.u32 %v81, 4294901760
    %v432 = vsub.f32 %v81, %v431
    %v433 = vand.u32 %v432, 4294901760
    %434 = vmatpush.msra.mxu0 %v433
    %v435 = vand.u32 %v80, 4294901760
    %v436 = vsub.f32 %v80, %v435
    %v437 = vand.u32 %v436, 4294901760
    %438 = vmatpush.msra.mxu0 %v437
    %v439 = vand.u32 %v79, 4294901760
    %v440 = vsub.f32 %v79, %v439
    %v441 = vand.u32 %v440, 4294901760
    %442 = vmatpush.msra.mxu0 %v441
    %v443 = vand.u32 %v78, 4294901760
    %v444 = vsub.f32 %v78, %v443
    %v445 = vand.u32 %v444, 4294901760
    %446 = vmatpush.msra.mxu0 %v445
    %v447 = vand.u32 %v77, 4294901760
    %v448 = vsub.f32 %v77, %v447
    %v449 = vand.u32 %v448, 4294901760
    %450 = vmatpush.msra.mxu0 %v449
    %v451 = vand.u32 %v76, 4294901760
    %v452 = vsub.f32 %v76, %v451
    %v453 = vand.u32 %v452, 4294901760
    %454 = vmatpush.msra.mxu0 %v453
    %v455 = vand.u32 %v75, 4294901760
    %v456 = vsub.f32 %v75, %v455
    %v457 = vand.u32 %v456, 4294901760
    %458 = vmatpush.msra.mxu0 %v457
    %v459 = vand.u32 %v74, 4294901760
    %v460 = vsub.f32 %v74, %v459
    %v461 = vand.u32 %v460, 4294901760
    %462 = vmatpush.msra.mxu0 %v461
    %v463 = vand.u32 %v73, 4294901760
    %v464 = vsub.f32 %v73, %v463
    %v465 = vand.u32 %v464, 4294901760
    %466 = vmatpush.msra.mxu0 %v465
    %v467 = vand.u32 %v72, 4294901760
    %v468 = vsub.f32 %v72, %v467
    %v469 = vand.u32 %v468, 4294901760
    %470 = vmatpush.msra.mxu0 %v469
    %v471 = vand.u32 %v71, 4294901760
    %v472 = vsub.f32 %v71, %v471
    %v473 = vand.u32 %v472, 4294901760
    %474 = vmatpush.msra.mxu0 %v473
    %v475 = vand.u32 %v70, 4294901760
    %v476 = vsub.f32 %v70, %v475
    %v477 = vand.u32 %v476, 4294901760
    %478 = vmatpush.msra.mxu0 %v477
    %v479 = vand.u32 %v69, 4294901760
    %v480 = vsub.f32 %v69, %v479
    %v481 = vand.u32 %v480, 4294901760
    %482 = vmatpush.msra.mxu0 %v481
    %v483 = vand.u32 %v68, 4294901760
    %v484 = vsub.f32 %v68, %v483
    %v485 = vand.u32 %v484, 4294901760
    %486 = vmatpush.msra.mxu0 %v485
    %v487 = vand.u32 %v67, 4294901760
    %v488 = vsub.f32 %v67, %v487
    %v489 = vand.u32 %v488, 4294901760
    %490 = vmatpush.msra.mxu0 %v489
    %v491 = vand.u32 %v66, 4294901760
    %v492 = vsub.f32 %v66, %v491
    %v493 = vand.u32 %v492, 4294901760
    %494 = vmatpush.msra.mxu0 %v493
    %v495 = vand.u32 %v58, 4294901760
    %496 = vmatmul.f32.gmra.mxu0 %v495
    %v497 = vpop.f32.mrf.mxu0
    %v498 = vadd.f32 %v429, %v497
    %499 = vdwg.mxu0
    %v500 = vand.u32 %v81, 4294901760
    %501 = vmatpush.msra.mxu0 %v500
    %v502 = vand.u32 %v80, 4294901760
    %503 = vmatpush.msra.mxu0 %v502
    %v504 = vand.u32 %v79, 4294901760
    %505 = vmatpush.msra.mxu0 %v504
    %v506 = vand.u32 %v78, 4294901760
    %507 = vmatpush.msra.mxu0 %v506
    %v508 = vand.u32 %v77, 4294901760
    %509 = vmatpush.msra.mxu0 %v508
    %v510 = vand.u32 %v76, 4294901760
    %511 = vmatpush.msra.mxu0 %v510
    %v512 = vand.u32 %v75, 4294901760
    %513 = vmatpush.msra.mxu0 %v512
    %v514 = vand.u32 %v74, 4294901760
    %515 = vmatpush.msra.mxu0 %v514
    %v516 = vand.u32 %v73, 4294901760
    %517 = vmatpush.msra.mxu0 %v516
    %v518 = vand.u32 %v72, 4294901760
    %519 = vmatpush.msra.mxu0 %v518
    %v520 = vand.u32 %v71, 4294901760
    %521 = vmatpush.msra.mxu0 %v520
    %v522 = vand.u32 %v70, 4294901760
    %523 = vmatpush.msra.mxu0 %v522
    %v524 = vand.u32 %v69, 4294901760
    %525 = vmatpush.msra.mxu0 %v524
    %v526 = vand.u32 %v68, 4294901760
    %527 = vmatpush.msra.mxu0 %v526
    %v528 = vand.u32 %v67, 4294901760
    %529 = vmatpush.msra.mxu0 %v528
    %v530 = vand.u32 %v66, 4294901760
    %531 = vmatpush.msra.mxu0 %v530
    %v532 = vand.u32 %v58, 4294901760
    %533 = vmatmul.f32.gmra.mxu0 %v532
    %v534 = vpop.f32.mrf.mxu0
    %v535 = vadd.f32 %v498, %v534
    %536 = vdwg.mxu0
    %v537 = vand.u32 %v97, 4294901760
    %538 = vmatpush.msra.mxu0 %v537
    %v539 = vand.u32 %v96, 4294901760
    %540 = vmatpush.msra.mxu0 %v539
    %v541 = vand.u32 %v95, 4294901760
    %542 = vmatpush.msra.mxu0 %v541
    %v543 = vand.u32 %v94, 4294901760
    %544 = vmatpush.msra.mxu0 %v543
    %v545 = vand.u32 %v93, 4294901760
    %546 = vmatpush.msra.mxu0 %v545
    %v547 = vand.u32 %v92, 4294901760
    %548 = vmatpush.msra.mxu0 %v547
    %v549 = vand.u32 %v91, 4294901760
    %550 = vmatpush.msra.mxu0 %v549
    %v551 = vand.u32 %v90, 4294901760
    %552 = vmatpush.msra.mxu0 %v551
    %v553 = vand.u32 %v89, 4294901760
    %554 = vmatpush.msra.mxu0 %v553
    %v555 = vand.u32 %v88, 4294901760
    %556 = vmatpush.msra.mxu0 %v555
    %v557 = vand.u32 %v87, 4294901760
    %558 = vmatpush.msra.mxu0 %v557
    %v559 = vand.u32 %v86, 4294901760
    %560 = vmatpush.msra.mxu0 %v559
    %v561 = vand.u32 %v85, 4294901760
    %562 = vmatpush.msra.mxu0 %v561
    %v563 = vand.u32 %v84, 4294901760
    %564 = vmatpush.msra.mxu0 %v563
    %v565 = vand.u32 %v83, 4294901760
    %566 = vmatpush.msra.mxu0 %v565
    %v567 = vand.u32 %v82, 4294901760
    %568 = vmatpush.msra.mxu0 %v567
    %v569 = vand.u32 %v59, 4294901760
    %v570 = vsub.f32 %v59, %v569
    %v571 = vand.u32 %v570, 4294901760
    %v572 = vsub.f32 %v570, %v571
    %v573 = vand.u32 %v572, 4294901760
    %574 = vmatmul.f32.gmra.mxu0 %v573
    %v575 = vpop.f32.mrf.mxu0
    %v576 = vadd.f32 %v535, %v575
    %577 = vdwg.mxu0
    %v578 = vand.u32 %v97, 4294901760
    %v579 = vsub.f32 %v97, %v578
    %v580 = vand.u32 %v579, 4294901760
    %v581 = vsub.f32 %v579, %v580
    %v582 = vand.u32 %v581, 4294901760
    %583 = vmatpush.msra.mxu0 %v582
    %v584 = vand.u32 %v96, 4294901760
    %v585 = vsub.f32 %v96, %v584
    %v586 = vand.u32 %v585, 4294901760
    %v587 = vsub.f32 %v585, %v586
    %v588 = vand.u32 %v587, 4294901760
    %589 = vmatpush.msra.mxu0 %v588
    %v590 = vand.u32 %v95, 4294901760
    %v591 = vsub.f32 %v95, %v590
    %v592 = vand.u32 %v591, 4294901760
    %v593 = vsub.f32 %v591, %v592
    %v594 = vand.u32 %v593, 4294901760
    %595 = vmatpush.msra.mxu0 %v594
    %v596 = vand.u32 %v94, 4294901760
    %v597 = vsub.f32 %v94, %v596
    %v598 = vand.u32 %v597, 4294901760
    %v599 = vsub.f32 %v597, %v598
    %v600 = vand.u32 %v599, 4294901760
    %601 = vmatpush.msra.mxu0 %v600
    %v602 = vand.u32 %v93, 4294901760
    %v603 = vsub.f32 %v93, %v602
    %v604 = vand.u32 %v603, 4294901760
    %v605 = vsub.f32 %v603, %v604
    %v606 = vand.u32 %v605, 4294901760
    %607 = vmatpush.msra.mxu0 %v606
    %v608 = vand.u32 %v92, 4294901760
    %v609 = vsub.f32 %v92, %v608
    %v610 = vand.u32 %v609, 4294901760
    %v611 = vsub.f32 %v609, %v610
    %v612 = vand.u32 %v611, 4294901760
    %613 = vmatpush.msra.mxu0 %v612
    %v614 = vand.u32 %v91, 4294901760
    %v615 = vsub.f32 %v91, %v614
    %v616 = vand.u32 %v615, 4294901760
    %v617 = vsub.f32 %v615, %v616
    %v618 = vand.u32 %v617, 4294901760
    %619 = vmatpush.msra.mxu0 %v618
    %v620 = vand.u32 %v90, 4294901760
    %v621 = vsub.f32 %v90, %v620
    %v622 = vand.u32 %v621, 4294901760
    %v623 = vsub.f32 %v621, %v622
    %v624 = vand.u32 %v623, 4294901760
    %625 = vmatpush.msra.mxu0 %v624
    %v626 = vand.u32 %v89, 4294901760
    %v627 = vsub.f32 %v89, %v626
    %v628 = vand.u32 %v627, 4294901760
    %v629 = vsub.f32 %v627, %v628
    %v630 = vand.u32 %v629, 4294901760
    %631 = vmatpush.msra.mxu0 %v630
    %v632 = vand.u32 %v88, 4294901760
    %v633 = vsub.f32 %v88, %v632
    %v634 = vand.u32 %v633, 4294901760
    %v635 = vsub.f32 %v633, %v634
    %v636 = vand.u32 %v635, 4294901760
    %637 = vmatpush.msra.mxu0 %v636
    %v638 = vand.u32 %v87, 4294901760
    %v639 = vsub.f32 %v87, %v638
    %v640 = vand.u32 %v639, 4294901760
    %v641 = vsub.f32 %v639, %v640
    %v642 = vand.u32 %v641, 4294901760
    %643 = vmatpush.msra.mxu0 %v642
    %v644 = vand.u32 %v86, 4294901760
    %v645 = vsub.f32 %v86, %v644
    %v646 = vand.u32 %v645, 4294901760
    %v647 = vsub.f32 %v645, %v646
    %v648 = vand.u32 %v647, 4294901760
    %649 = vmatpush.msra.mxu0 %v648
    %v650 = vand.u32 %v85, 4294901760
    %v651 = vsub.f32 %v85, %v650
    %v652 = vand.u32 %v651, 4294901760
    %v653 = vsub.f32 %v651, %v652
    %v654 = vand.u32 %v653, 4294901760
    %655 = vmatpush.msra.mxu0 %v654
    %v656 = vand.u32 %v84, 4294901760
    %v657 = vsub.f32 %v84, %v656
    %v658 = vand.u32 %v657, 4294901760
    %v659 = vsub.f32 %v657, %v658
    %v660 = vand.u32 %v659, 4294901760
    %661 = vmatpush.msra.mxu0 %v660
    %v662 = vand.u32 %v83, 4294901760
    %v663 = vsub.f32 %v83, %v662
    %v664 = vand.u32 %v663, 4294901760
    %v665 = vsub.f32 %v663, %v664
    %v666 = vand.u32 %v665, 4294901760
    %667 = vmatpush.msra.mxu0 %v666
    %v668 = vand.u32 %v82, 4294901760
    %v669 = vsub.f32 %v82, %v668
    %v670 = vand.u32 %v669, 4294901760
    %v671 = vsub.f32 %v669, %v670
    %v672 = vand.u32 %v671, 4294901760
    %673 = vmatpush.msra.mxu0 %v672
    %v674 = vand.u32 %v59, 4294901760
    %675 = vmatmul.f32.gmra.mxu0 %v674
    %v676 = vpop.f32.mrf.mxu0
    %v677 = vadd.f32 %v576, %v676
    %678 = vdwg.mxu0
    %v679 = vand.u32 %v97, 4294901760
    %v680 = vsub.f32 %v97, %v679
    %681 = vmatpush.msra.mxu0 %v680
    %v682 = vand.u32 %v96, 4294901760
    %v683 = vsub.f32 %v96, %v682
    %684 = vmatpush.msra.mxu0 %v683
    %v685 = vand.u32 %v95, 4294901760
    %v686 = vsub.f32 %v95, %v685
    %687 = vmatpush.msra.mxu0 %v686
    %v688 = vand.u32 %v94, 4294901760
    %v689 = vsub.f32 %v94, %v688
    %690 = vmatpush.msra.mxu0 %v689
    %v691 = vand.u32 %v93, 4294901760
    %v692 = vsub.f32 %v93, %v691
    %693 = vmatpush.msra.mxu0 %v692
    %v694 = vand.u32 %v92, 4294901760
    %v695 = vsub.f32 %v92, %v694
    %696 = vmatpush.msra.mxu0 %v695
    %v697 = vand.u32 %v91, 4294901760
    %v698 = vsub.f32 %v91, %v697
    %699 = vmatpush.msra.mxu0 %v698
    %v700 = vand.u32 %v90, 4294901760
    %v701 = vsub.f32 %v90, %v700
    %702 = vmatpush.msra.mxu0 %v701
    %v703 = vand.u32 %v89, 4294901760
    %v704 = vsub.f32 %v89, %v703
    %705 = vmatpush.msra.mxu0 %v704
    %v706 = vand.u32 %v88, 4294901760
    %v707 = vsub.f32 %v88, %v706
    %708 = vmatpush.msra.mxu0 %v707
    %v709 = vand.u32 %v87, 4294901760
    %v710 = vsub.f32 %v87, %v709
    %711 = vmatpush.msra.mxu0 %v710
    %v712 = vand.u32 %v86, 4294901760
    %v713 = vsub.f32 %v86, %v712
    %714 = vmatpush.msra.mxu0 %v713
    %v715 = vand.u32 %v85, 4294901760
    %v716 = vsub.f32 %v85, %v715
    %717 = vmatpush.msra.mxu0 %v716
    %v718 = vand.u32 %v84, 4294901760
    %v719 = vsub.f32 %v84, %v718
    %720 = vmatpush.msra.mxu0 %v719
    %v721 = vand.u32 %v83, 4294901760
    %v722 = vsub.f32 %v83, %v721
    %723 = vmatpush.msra.mxu0 %v722
    %v724 = vand.u32 %v82, 4294901760
    %v725 = vsub.f32 %v82, %v724
    %726 = vmatpush.msra.mxu0 %v725
    %v727 = vand.u32 %v59, 4294901760
    %v728 = vsub.f32 %v59, %v727
    %729 = vmatmul.f32.gmra.mxu0 %v728
    %v730 = vpop.f32.mrf.mxu0
    %v731 = vadd.f32 %v677, %v730
    %732 = vdwg.mxu0
    %v733 = vand.u32 %v97, 4294901760
    %734 = vmatpush.msra.mxu0 %v733
    %v735 = vand.u32 %v96, 4294901760
    %736 = vmatpush.msra.mxu0 %v735
    %v737 = vand.u32 %v95, 4294901760
    %738 = vmatpush.msra.mxu0 %v737
    %v739 = vand.u32 %v94, 4294901760
    %740 = vmatpush.msra.mxu0 %v739
    %v741 = vand.u32 %v93, 4294901760
    %742 = vmatpush.msra.mxu0 %v741
    %v743 = vand.u32 %v92, 4294901760
    %744 = vmatpush.msra.mxu0 %v743
    %v745 = vand.u32 %v91, 4294901760
    %746 = vmatpush.msra.mxu0 %v745
    %v747 = vand.u32 %v90, 4294901760
    %748 = vmatpush.msra.mxu0 %v747
    %v749 = vand.u32 %v89, 4294901760
    %750 = vmatpush.msra.mxu0 %v749
    %v751 = vand.u32 %v88, 4294901760
    %752 = vmatpush.msra.mxu0 %v751
    %v753 = vand.u32 %v87, 4294901760
    %754 = vmatpush.msra.mxu0 %v753
    %v755 = vand.u32 %v86, 4294901760
    %756 = vmatpush.msra.mxu0 %v755
    %v757 = vand.u32 %v85, 4294901760
    %758 = vmatpush.msra.mxu0 %v757
    %v759 = vand.u32 %v84, 4294901760
    %760 = vmatpush.msra.mxu0 %v759
    %v761 = vand.u32 %v83, 4294901760
    %762 = vmatpush.msra.mxu0 %v761
    %v763 = vand.u32 %v82, 4294901760
    %764 = vmatpush.msra.mxu0 %v763
    %v765 = vand.u32 %v59, 4294901760
    %v766 = vsub.f32 %v59, %v765
    %v767 = vand.u32 %v766, 4294901760
    %768 = vmatmul.f32.gmra.mxu0 %v767
    %v769 = vpop.f32.mrf.mxu0
    %v770 = vadd.f32 %v731, %v769
    %771 = vdwg.mxu0
    %v772 = vand.u32 %v97, 4294901760
    %v773 = vsub.f32 %v97, %v772
    %v774 = vand.u32 %v773, 4294901760
    %775 = vmatpush.msra.mxu0 %v774
    %v776 = vand.u32 %v96, 4294901760
    %v777 = vsub.f32 %v96, %v776
    %v778 = vand.u32 %v777, 4294901760
    %779 = vmatpush.msra.mxu0 %v778
    %v780 = vand.u32 %v95, 4294901760
    %v781 = vsub.f32 %v95, %v780
    %v782 = vand.u32 %v781, 4294901760
    %783 = vmatpush.msra.mxu0 %v782
    %v784 = vand.u32 %v94, 4294901760
    %v785 = vsub.f32 %v94, %v784
    %v786 = vand.u32 %v785, 4294901760
    %787 = vmatpush.msra.mxu0 %v786
    %v788 = vand.u32 %v93, 4294901760
    %v789 = vsub.f32 %v93, %v788
    %v790 = vand.u32 %v789, 4294901760
    %791 = vmatpush.msra.mxu0 %v790
    %v792 = vand.u32 %v92, 4294901760
    %v793 = vsub.f32 %v92, %v792
    %v794 = vand.u32 %v793, 4294901760
    %795 = vmatpush.msra.mxu0 %v794
    %v796 = vand.u32 %v91, 4294901760
    %v797 = vsub.f32 %v91, %v796
    %v798 = vand.u32 %v797, 4294901760
    %799 = vmatpush.msra.mxu0 %v798
    %v800 = vand.u32 %v90, 4294901760
    %v801 = vsub.f32 %v90, %v800
    %v802 = vand.u32 %v801, 4294901760
    %803 = vmatpush.msra.mxu0 %v802
    %v804 = vand.u32 %v89, 4294901760
    %v805 = vsub.f32 %v89, %v804
    %v806 = vand.u32 %v805, 4294901760
    %807 = vmatpush.msra.mxu0 %v806
    %v808 = vand.u32 %v88, 4294901760
    %v809 = vsub.f32 %v88, %v808
    %v810 = vand.u32 %v809, 4294901760
    %811 = vmatpush.msra.mxu0 %v810
    %v812 = vand.u32 %v87, 4294901760
    %v813 = vsub.f32 %v87, %v812
    %v814 = vand.u32 %v813, 4294901760
    %815 = vmatpush.msra.mxu0 %v814
    %v816 = vand.u32 %v86, 4294901760
    %v817 = vsub.f32 %v86, %v816
    %v818 = vand.u32 %v817, 4294901760
    %819 = vmatpush.msra.mxu0 %v818
    %v820 = vand.u32 %v85, 4294901760
    %v821 = vsub.f32 %v85, %v820
    %v822 = vand.u32 %v821, 4294901760
    %823 = vmatpush.msra.mxu0 %v822
    %v824 = vand.u32 %v84, 4294901760
    %v825 = vsub.f32 %v84, %v824
    %v826 = vand.u32 %v825, 4294901760
    %827 = vmatpush.msra.mxu0 %v826
    %v828 = vand.u32 %v83, 4294901760
    %v829 = vsub.f32 %v83, %v828
    %v830 = vand.u32 %v829, 4294901760
    %831 = vmatpush.msra.mxu0 %v830
    %v832 = vand.u32 %v82, 4294901760
    %v833 = vsub.f32 %v82, %v832
    %v834 = vand.u32 %v833, 4294901760
    %835 = vmatpush.msra.mxu0 %v834
    %v836 = vand.u32 %v59, 4294901760
    %837 = vmatmul.f32.gmra.mxu0 %v836
    %v838 = vpop.f32.mrf.mxu0
    %v839 = vadd.f32 %v770, %v838
    %840 = vdwg.mxu0
    %v841 = vand.u32 %v97, 4294901760
    %842 = vmatpush.msra.mxu0 %v841
    %v843 = vand.u32 %v96, 4294901760
    %844 = vmatpush.msra.mxu0 %v843
    %v845 = vand.u32 %v95, 4294901760
    %846 = vmatpush.msra.mxu0 %v845
    %v847 = vand.u32 %v94, 4294901760
    %848 = vmatpush.msra.mxu0 %v847
    %v849 = vand.u32 %v93, 4294901760
    %850 = vmatpush.msra.mxu0 %v849
    %v851 = vand.u32 %v92, 4294901760
    %852 = vmatpush.msra.mxu0 %v851
    %v853 = vand.u32 %v91, 4294901760
    %854 = vmatpush.msra.mxu0 %v853
    %v855 = vand.u32 %v90, 4294901760
    %856 = vmatpush.msra.mxu0 %v855
    %v857 = vand.u32 %v89, 4294901760
    %858 = vmatpush.msra.mxu0 %v857
    %v859 = vand.u32 %v88, 4294901760
    %860 = vmatpush.msra.mxu0 %v859
    %v861 = vand.u32 %v87, 4294901760
    %862 = vmatpush.msra.mxu0 %v861
    %v863 = vand.u32 %v86, 4294901760
    %864 = vmatpush.msra.mxu0 %v863
    %v865 = vand.u32 %v85, 4294901760
    %866 = vmatpush.msra.mxu0 %v865
    %v867 = vand.u32 %v84, 4294901760
    %868 = vmatpush.msra.mxu0 %v867
    %v869 = vand.u32 %v83, 4294901760
    %870 = vmatpush.msra.mxu0 %v869
    %v871 = vand.u32 %v82, 4294901760
    %872 = vmatpush.msra.mxu0 %v871
    %v873 = vand.u32 %v59, 4294901760
    %874 = vmatmul.f32.gmra.mxu0 %v873
    %v875 = vpop.f32.mrf.mxu0
    %v876 = vadd.f32 %v839, %v875
    %877 = vdwg.mxu0
    %v878 = vand.u32 %v113, 4294901760
    %879 = vmatpush.msra.mxu0 %v878
    %v880 = vand.u32 %v112, 4294901760
    %881 = vmatpush.msra.mxu0 %v880
    %v882 = vand.u32 %v111, 4294901760
    %883 = vmatpush.msra.mxu0 %v882
    %v884 = vand.u32 %v110, 4294901760
    %885 = vmatpush.msra.mxu0 %v884
    %v886 = vand.u32 %v109, 4294901760
    %887 = vmatpush.msra.mxu0 %v886
    %v888 = vand.u32 %v108, 4294901760
    %889 = vmatpush.msra.mxu0 %v888
    %v890 = vand.u32 %v107, 4294901760
    %891 = vmatpush.msra.mxu0 %v890
    %v892 = vand.u32 %v106, 4294901760
    %893 = vmatpush.msra.mxu0 %v892
    %v894 = vand.u32 %v105, 4294901760
    %895 = vmatpush.msra.mxu0 %v894
    %v896 = vand.u32 %v104, 4294901760
    %897 = vmatpush.msra.mxu0 %v896
    %v898 = vand.u32 %v103, 4294901760
    %899 = vmatpush.msra.mxu0 %v898
    %v900 = vand.u32 %v102, 4294901760
    %901 = vmatpush.msra.mxu0 %v900
    %v902 = vand.u32 %v101, 4294901760
    %903 = vmatpush.msra.mxu0 %v902
    %v904 = vand.u32 %v100, 4294901760
    %905 = vmatpush.msra.mxu0 %v904
    %v906 = vand.u32 %v99, 4294901760
    %907 = vmatpush.msra.mxu0 %v906
    %v908 = vand.u32 %v98, 4294901760
    %909 = vmatpush.msra.mxu0 %v908
    %v910 = vand.u32 %v60, 4294901760
    %v911 = vsub.f32 %v60, %v910
    %v912 = vand.u32 %v911, 4294901760
    %v913 = vsub.f32 %v911, %v912
    %v914 = vand.u32 %v913, 4294901760
    %915 = vmatmul.f32.gmra.mxu0 %v914
    %v916 = vpop.f32.mrf.mxu0
    %v917 = vadd.f32 %v876, %v916
    %918 = vdwg.mxu0
    %v919 = vand.u32 %v113, 4294901760
    %v920 = vsub.f32 %v113, %v919
    %v921 = vand.u32 %v920, 4294901760
    %v922 = vsub.f32 %v920, %v921
    %v923 = vand.u32 %v922, 4294901760
    %924 = vmatpush.msra.mxu0 %v923
    %v925 = vand.u32 %v112, 4294901760
    %v926 = vsub.f32 %v112, %v925
    %v927 = vand.u32 %v926, 4294901760
    %v928 = vsub.f32 %v926, %v927
    %v929 = vand.u32 %v928, 4294901760
    %930 = vmatpush.msra.mxu0 %v929
    %v931 = vand.u32 %v111, 4294901760
    %v932 = vsub.f32 %v111, %v931
    %v933 = vand.u32 %v932, 4294901760
    %v934 = vsub.f32 %v932, %v933
    %v935 = vand.u32 %v934, 4294901760
    %936 = vmatpush.msra.mxu0 %v935
    %v937 = vand.u32 %v110, 4294901760
    %v938 = vsub.f32 %v110, %v937
    %v939 = vand.u32 %v938, 4294901760
    %v940 = vsub.f32 %v938, %v939
    %v941 = vand.u32 %v940, 4294901760
    %942 = vmatpush.msra.mxu0 %v941
    %v943 = vand.u32 %v109, 4294901760
    %v944 = vsub.f32 %v109, %v943
    %v945 = vand.u32 %v944, 4294901760
    %v946 = vsub.f32 %v944, %v945
    %v947 = vand.u32 %v946, 4294901760
    %948 = vmatpush.msra.mxu0 %v947
    %v949 = vand.u32 %v108, 4294901760
    %v950 = vsub.f32 %v108, %v949
    %v951 = vand.u32 %v950, 4294901760
    %v952 = vsub.f32 %v950, %v951
    %v953 = vand.u32 %v952, 4294901760
    %954 = vmatpush.msra.mxu0 %v953
    %v955 = vand.u32 %v107, 4294901760
    %v956 = vsub.f32 %v107, %v955
    %v957 = vand.u32 %v956, 4294901760
    %v958 = vsub.f32 %v956, %v957
    %v959 = vand.u32 %v958, 4294901760
    %960 = vmatpush.msra.mxu0 %v959
    %v961 = vand.u32 %v106, 4294901760
    %v962 = vsub.f32 %v106, %v961
    %v963 = vand.u32 %v962, 4294901760
    %v964 = vsub.f32 %v962, %v963
    %v965 = vand.u32 %v964, 4294901760
    %966 = vmatpush.msra.mxu0 %v965
    %v967 = vand.u32 %v105, 4294901760
    %v968 = vsub.f32 %v105, %v967
    %v969 = vand.u32 %v968, 4294901760
    %v970 = vsub.f32 %v968, %v969
    %v971 = vand.u32 %v970, 4294901760
    %972 = vmatpush.msra.mxu0 %v971
    %v973 = vand.u32 %v104, 4294901760
    %v974 = vsub.f32 %v104, %v973
    %v975 = vand.u32 %v974, 4294901760
    %v976 = vsub.f32 %v974, %v975
    %v977 = vand.u32 %v976, 4294901760
    %978 = vmatpush.msra.mxu0 %v977
    %v979 = vand.u32 %v103, 4294901760
    %v980 = vsub.f32 %v103, %v979
    %v981 = vand.u32 %v980, 4294901760
    %v982 = vsub.f32 %v980, %v981
    %v983 = vand.u32 %v982, 4294901760
    %984 = vmatpush.msra.mxu0 %v983
    %v985 = vand.u32 %v102, 4294901760
    %v986 = vsub.f32 %v102, %v985
    %v987 = vand.u32 %v986, 4294901760
    %v988 = vsub.f32 %v986, %v987
    %v989 = vand.u32 %v988, 4294901760
    %990 = vmatpush.msra.mxu0 %v989
    %v991 = vand.u32 %v101, 4294901760
    %v992 = vsub.f32 %v101, %v991
    %v993 = vand.u32 %v992, 4294901760
    %v994 = vsub.f32 %v992, %v993
    %v995 = vand.u32 %v994, 4294901760
    %996 = vmatpush.msra.mxu0 %v995
    %v997 = vand.u32 %v100, 4294901760
    %v998 = vsub.f32 %v100, %v997
    %v999 = vand.u32 %v998, 4294901760
    %v1000 = vsub.f32 %v998, %v999
    %v1001 = vand.u32 %v1000, 4294901760
    %1002 = vmatpush.msra.mxu0 %v1001
    %v1003 = vand.u32 %v99, 4294901760
    %v1004 = vsub.f32 %v99, %v1003
    %v1005 = vand.u32 %v1004, 4294901760
    %v1006 = vsub.f32 %v1004, %v1005
    %v1007 = vand.u32 %v1006, 4294901760
    %1008 = vmatpush.msra.mxu0 %v1007
    %v1009 = vand.u32 %v98, 4294901760
    %v1010 = vsub.f32 %v98, %v1009
    %v1011 = vand.u32 %v1010, 4294901760
    %v1012 = vsub.f32 %v1010, %v1011
    %v1013 = vand.u32 %v1012, 4294901760
    %1014 = vmatpush.msra.mxu0 %v1013
    %v1015 = vand.u32 %v60, 4294901760
    %1016 = vmatmul.f32.gmra.mxu0 %v1015
    %v1017 = vpop.f32.mrf.mxu0
    %v1018 = vadd.f32 %v917, %v1017
    %1019 = vdwg.mxu0
    %v1020 = vand.u32 %v113, 4294901760
    %v1021 = vsub.f32 %v113, %v1020
    %1022 = vmatpush.msra.mxu0 %v1021
    %v1023 = vand.u32 %v112, 4294901760
    %v1024 = vsub.f32 %v112, %v1023
    %1025 = vmatpush.msra.mxu0 %v1024
    %v1026 = vand.u32 %v111, 4294901760
    %v1027 = vsub.f32 %v111, %v1026
    %1028 = vmatpush.msra.mxu0 %v1027
    %v1029 = vand.u32 %v110, 4294901760
    %v1030 = vsub.f32 %v110, %v1029
    %1031 = vmatpush.msra.mxu0 %v1030
    %v1032 = vand.u32 %v109, 4294901760
    %v1033 = vsub.f32 %v109, %v1032
    %1034 = vmatpush.msra.mxu0 %v1033
    %v1035 = vand.u32 %v108, 4294901760
    %v1036 = vsub.f32 %v108, %v1035
    %1037 = vmatpush.msra.mxu0 %v1036
    %v1038 = vand.u32 %v107, 4294901760
    %v1039 = vsub.f32 %v107, %v1038
    %1040 = vmatpush.msra.mxu0 %v1039
    %v1041 = vand.u32 %v106, 4294901760
    %v1042 = vsub.f32 %v106, %v1041
    %1043 = vmatpush.msra.mxu0 %v1042
    %v1044 = vand.u32 %v105, 4294901760
    %v1045 = vsub.f32 %v105, %v1044
    %1046 = vmatpush.msra.mxu0 %v1045
    %v1047 = vand.u32 %v104, 4294901760
    %v1048 = vsub.f32 %v104, %v1047
    %1049 = vmatpush.msra.mxu0 %v1048
    %v1050 = vand.u32 %v103, 4294901760
    %v1051 = vsub.f32 %v103, %v1050
    %1052 = vmatpush.msra.mxu0 %v1051
    %v1053 = vand.u32 %v102, 4294901760
    %v1054 = vsub.f32 %v102, %v1053
    %1055 = vmatpush.msra.mxu0 %v1054
    %v1056 = vand.u32 %v101, 4294901760
    %v1057 = vsub.f32 %v101, %v1056
    %1058 = vmatpush.msra.mxu0 %v1057
    %v1059 = vand.u32 %v100, 4294901760
    %v1060 = vsub.f32 %v100, %v1059
    %1061 = vmatpush.msra.mxu0 %v1060
    %v1062 = vand.u32 %v99, 4294901760
    %v1063 = vsub.f32 %v99, %v1062
    %1064 = vmatpush.msra.mxu0 %v1063
    %v1065 = vand.u32 %v98, 4294901760
    %v1066 = vsub.f32 %v98, %v1065
    %1067 = vmatpush.msra.mxu0 %v1066
    %v1068 = vand.u32 %v60, 4294901760
    %v1069 = vsub.f32 %v60, %v1068
    %1070 = vmatmul.f32.gmra.mxu0 %v1069
    %v1071 = vpop.f32.mrf.mxu0
    %v1072 = vadd.f32 %v1018, %v1071
    %1073 = vdwg.mxu0
    %v1074 = vand.u32 %v113, 4294901760
    %1075 = vmatpush.msra.mxu0 %v1074
    %v1076 = vand.u32 %v112, 4294901760
    %1077 = vmatpush.msra.mxu0 %v1076
    %v1078 = vand.u32 %v111, 4294901760
    %1079 = vmatpush.msra.mxu0 %v1078
    %v1080 = vand.u32 %v110, 4294901760
    %1081 = vmatpush.msra.mxu0 %v1080
    %v1082 = vand.u32 %v109, 4294901760
    %1083 = vmatpush.msra.mxu0 %v1082
    %v1084 = vand.u32 %v108, 4294901760
    %1085 = vmatpush.msra.mxu0 %v1084
    %v1086 = vand.u32 %v107, 4294901760
    %1087 = vmatpush.msra.mxu0 %v1086
    %v1088 = vand.u32 %v106, 4294901760
    %1089 = vmatpush.msra.mxu0 %v1088
    %v1090 = vand.u32 %v105, 4294901760
    %1091 = vmatpush.msra.mxu0 %v1090
    %v1092 = vand.u32 %v104, 4294901760
    %1093 = vmatpush.msra.mxu0 %v1092
    %v1094 = vand.u32 %v103, 4294901760
    %1095 = vmatpush.msra.mxu0 %v1094
    %v1096 = vand.u32 %v102, 4294901760
    %1097 = vmatpush.msra.mxu0 %v1096
    %v1098 = vand.u32 %v101, 4294901760
    %1099 = vmatpush.msra.mxu0 %v1098
    %v1100 = vand.u32 %v100, 4294901760
    %1101 = vmatpush.msra.mxu0 %v1100
    %v1102 = vand.u32 %v99, 4294901760
    %1103 = vmatpush.msra.mxu0 %v1102
    %v1104 = vand.u32 %v98, 4294901760
    %1105 = vmatpush.msra.mxu0 %v1104
    %v1106 = vand.u32 %v60, 4294901760
    %v1107 = vsub.f32 %v60, %v1106
    %v1108 = vand.u32 %v1107, 4294901760
    %1109 = vmatmul.f32.gmra.mxu0 %v1108
    %v1110 = vpop.f32.mrf.mxu0
    %v1111 = vadd.f32 %v1072, %v1110
    %1112 = vdwg.mxu0
    %v1113 = vand.u32 %v113, 4294901760
    %v1114 = vsub.f32 %v113, %v1113
    %v1115 = vand.u32 %v1114, 4294901760
    %1116 = vmatpush.msra.mxu0 %v1115
    %v1117 = vand.u32 %v112, 4294901760
    %v1118 = vsub.f32 %v112, %v1117
    %v1119 = vand.u32 %v1118, 4294901760
    %1120 = vmatpush.msra.mxu0 %v1119
    %v1121 = vand.u32 %v111, 4294901760
    %v1122 = vsub.f32 %v111, %v1121
    %v1123 = vand.u32 %v1122, 4294901760
    %1124 = vmatpush.msra.mxu0 %v1123
    %v1125 = vand.u32 %v110, 4294901760
    %v1126 = vsub.f32 %v110, %v1125
    %v1127 = vand.u32 %v1126, 4294901760
    %1128 = vmatpush.msra.mxu0 %v1127
    %v1129 = vand.u32 %v109, 4294901760
    %v1130 = vsub.f32 %v109, %v1129
    %v1131 = vand.u32 %v1130, 4294901760
    %1132 = vmatpush.msra.mxu0 %v1131
    %v1133 = vand.u32 %v108, 4294901760
    %v1134 = vsub.f32 %v108, %v1133
    %v1135 = vand.u32 %v1134, 4294901760
    %1136 = vmatpush.msra.mxu0 %v1135
    %v1137 = vand.u32 %v107, 4294901760
    %v1138 = vsub.f32 %v107, %v1137
    %v1139 = vand.u32 %v1138, 4294901760
    %1140 = vmatpush.msra.mxu0 %v1139
    %v1141 = vand.u32 %v106, 4294901760
    %v1142 = vsub.f32 %v106, %v1141
    %v1143 = vand.u32 %v1142, 4294901760
    %1144 = vmatpush.msra.mxu0 %v1143
    %v1145 = vand.u32 %v105, 4294901760
    %v1146 = vsub.f32 %v105, %v1145
    %v1147 = vand.u32 %v1146, 4294901760
    %1148 = vmatpush.msra.mxu0 %v1147
    %v1149 = vand.u32 %v104, 4294901760
    %v1150 = vsub.f32 %v104, %v1149
    %v1151 = vand.u32 %v1150, 4294901760
    %1152 = vmatpush.msra.mxu0 %v1151
    %v1153 = vand.u32 %v103, 4294901760
    %v1154 = vsub.f32 %v103, %v1153
    %v1155 = vand.u32 %v1154, 4294901760
    %1156 = vmatpush.msra.mxu0 %v1155
    %v1157 = vand.u32 %v102, 4294901760
    %v1158 = vsub.f32 %v102, %v1157
    %v1159 = vand.u32 %v1158, 4294901760
    %1160 = vmatpush.msra.mxu0 %v1159
    %v1161 = vand.u32 %v101, 4294901760
    %v1162 = vsub.f32 %v101, %v1161
    %v1163 = vand.u32 %v1162, 4294901760
    %1164 = vmatpush.msra.mxu0 %v1163
    %v1165 = vand.u32 %v100, 4294901760
    %v1166 = vsub.f32 %v100, %v1165
    %v1167 = vand.u32 %v1166, 4294901760
    %1168 = vmatpush.msra.mxu0 %v1167
    %v1169 = vand.u32 %v99, 4294901760
    %v1170 = vsub.f32 %v99, %v1169
    %v1171 = vand.u32 %v1170, 4294901760
    %1172 = vmatpush.msra.mxu0 %v1171
    %v1173 = vand.u32 %v98, 4294901760
    %v1174 = vsub.f32 %v98, %v1173
    %v1175 = vand.u32 %v1174, 4294901760
    %1176 = vmatpush.msra.mxu0 %v1175
    %v1177 = vand.u32 %v60, 4294901760
    %1178 = vmatmul.f32.gmra.mxu0 %v1177
    %v1179 = vpop.f32.mrf.mxu0
    %v1180 = vadd.f32 %v1111, %v1179
    %1181 = vdwg.mxu0
    %v1182 = vand.u32 %v113, 4294901760
    %1183 = vmatpush.msra.mxu0 %v1182
    %v1184 = vand.u32 %v112, 4294901760
    %1185 = vmatpush.msra.mxu0 %v1184
    %v1186 = vand.u32 %v111, 4294901760
    %1187 = vmatpush.msra.mxu0 %v1186
    %v1188 = vand.u32 %v110, 4294901760
    %1189 = vmatpush.msra.mxu0 %v1188
    %v1190 = vand.u32 %v109, 4294901760
    %1191 = vmatpush.msra.mxu0 %v1190
    %v1192 = vand.u32 %v108, 4294901760
    %1193 = vmatpush.msra.mxu0 %v1192
    %v1194 = vand.u32 %v107, 4294901760
    %1195 = vmatpush.msra.mxu0 %v1194
    %v1196 = vand.u32 %v106, 4294901760
    %1197 = vmatpush.msra.mxu0 %v1196
    %v1198 = vand.u32 %v105, 4294901760
    %1199 = vmatpush.msra.mxu0 %v1198
    %v1200 = vand.u32 %v104, 4294901760
    %1201 = vmatpush.msra.mxu0 %v1200
    %v1202 = vand.u32 %v103, 4294901760
    %1203 = vmatpush.msra.mxu0 %v1202
    %v1204 = vand.u32 %v102, 4294901760
    %1205 = vmatpush.msra.mxu0 %v1204
    %v1206 = vand.u32 %v101, 4294901760
    %1207 = vmatpush.msra.mxu0 %v1206
    %v1208 = vand.u32 %v100, 4294901760
    %1209 = vmatpush.msra.mxu0 %v1208
    %v1210 = vand.u32 %v99, 4294901760
    %1211 = vmatpush.msra.mxu0 %v1210
    %v1212 = vand.u32 %v98, 4294901760
    %1213 = vmatpush.msra.mxu0 %v1212
    %v1214 = vand.u32 %v60, 4294901760
    %1215 = vmatmul.f32.gmra.mxu0 %v1214
    %v1216 = vpop.f32.mrf.mxu0
    %v1217 = vadd.f32 %v1180, %v1216
    %1218 = vdwg.mxu0
    %v1219 = vand.u32 %v129, 4294901760
    %1220 = vmatpush.msra.mxu0 %v1219
    %v1221 = vand.u32 %v128, 4294901760
    %1222 = vmatpush.msra.mxu0 %v1221
    %v1223 = vand.u32 %v127, 4294901760
    %1224 = vmatpush.msra.mxu0 %v1223
    %v1225 = vand.u32 %v126, 4294901760
    %1226 = vmatpush.msra.mxu0 %v1225
    %v1227 = vand.u32 %v125, 4294901760
    %1228 = vmatpush.msra.mxu0 %v1227
    %v1229 = vand.u32 %v124, 4294901760
    %1230 = vmatpush.msra.mxu0 %v1229
    %v1231 = vand.u32 %v123, 4294901760
    %1232 = vmatpush.msra.mxu0 %v1231
    %v1233 = vand.u32 %v122, 4294901760
    %1234 = vmatpush.msra.mxu0 %v1233
    %v1235 = vand.u32 %v121, 4294901760
    %1236 = vmatpush.msra.mxu0 %v1235
    %v1237 = vand.u32 %v120, 4294901760
    %1238 = vmatpush.msra.mxu0 %v1237
    %v1239 = vand.u32 %v119, 4294901760
    %1240 = vmatpush.msra.mxu0 %v1239
    %v1241 = vand.u32 %v118, 4294901760
    %1242 = vmatpush.msra.mxu0 %v1241
    %v1243 = vand.u32 %v117, 4294901760
    %1244 = vmatpush.msra.mxu0 %v1243
    %v1245 = vand.u32 %v116, 4294901760
    %1246 = vmatpush.msra.mxu0 %v1245
    %v1247 = vand.u32 %v115, 4294901760
    %1248 = vmatpush.msra.mxu0 %v1247
    %v1249 = vand.u32 %v114, 4294901760
    %1250 = vmatpush.msra.mxu0 %v1249
    %v1251 = vand.u32 %v61, 4294901760
    %v1252 = vsub.f32 %v61, %v1251
    %v1253 = vand.u32 %v1252, 4294901760
    %v1254 = vsub.f32 %v1252, %v1253
    %v1255 = vand.u32 %v1254, 4294901760
    %1256 = vmatmul.f32.gmra.mxu0 %v1255
    %v1257 = vpop.f32.mrf.mxu0
    %v1258 = vadd.f32 %v1217, %v1257
    %1259 = vdwg.mxu0
    %v1260 = vand.u32 %v129, 4294901760
    %v1261 = vsub.f32 %v129, %v1260
    %v1262 = vand.u32 %v1261, 4294901760
    %v1263 = vsub.f32 %v1261, %v1262
    %v1264 = vand.u32 %v1263, 4294901760
    %1265 = vmatpush.msra.mxu0 %v1264
    %v1266 = vand.u32 %v128, 4294901760
    %v1267 = vsub.f32 %v128, %v1266
    %v1268 = vand.u32 %v1267, 4294901760
    %v1269 = vsub.f32 %v1267, %v1268
    %v1270 = vand.u32 %v1269, 4294901760
    %1271 = vmatpush.msra.mxu0 %v1270
    %v1272 = vand.u32 %v127, 4294901760
    %v1273 = vsub.f32 %v127, %v1272
    %v1274 = vand.u32 %v1273, 4294901760
    %v1275 = vsub.f32 %v1273, %v1274
    %v1276 = vand.u32 %v1275, 4294901760
    %1277 = vmatpush.msra.mxu0 %v1276
    %v1278 = vand.u32 %v126, 4294901760
    %v1279 = vsub.f32 %v126, %v1278
    %v1280 = vand.u32 %v1279, 4294901760
    %v1281 = vsub.f32 %v1279, %v1280
    %v1282 = vand.u32 %v1281, 4294901760
    %1283 = vmatpush.msra.mxu0 %v1282
    %v1284 = vand.u32 %v125, 4294901760
    %v1285 = vsub.f32 %v125, %v1284
    %v1286 = vand.u32 %v1285, 4294901760
    %v1287 = vsub.f32 %v1285, %v1286
    %v1288 = vand.u32 %v1287, 4294901760
    %1289 = vmatpush.msra.mxu0 %v1288
    %v1290 = vand.u32 %v124, 4294901760
    %v1291 = vsub.f32 %v124, %v1290
    %v1292 = vand.u32 %v1291, 4294901760
    %v1293 = vsub.f32 %v1291, %v1292
    %v1294 = vand.u32 %v1293, 4294901760
    %1295 = vmatpush.msra.mxu0 %v1294
    %v1296 = vand.u32 %v123, 4294901760
    %v1297 = vsub.f32 %v123, %v1296
    %v1298 = vand.u32 %v1297, 4294901760
    %v1299 = vsub.f32 %v1297, %v1298
    %v1300 = vand.u32 %v1299, 4294901760
    %1301 = vmatpush.msra.mxu0 %v1300
    %v1302 = vand.u32 %v122, 4294901760
    %v1303 = vsub.f32 %v122, %v1302
    %v1304 = vand.u32 %v1303, 4294901760
    %v1305 = vsub.f32 %v1303, %v1304
    %v1306 = vand.u32 %v1305, 4294901760
    %1307 = vmatpush.msra.mxu0 %v1306
    %v1308 = vand.u32 %v121, 4294901760
    %v1309 = vsub.f32 %v121, %v1308
    %v1310 = vand.u32 %v1309, 4294901760
    %v1311 = vsub.f32 %v1309, %v1310
    %v1312 = vand.u32 %v1311, 4294901760
    %1313 = vmatpush.msra.mxu0 %v1312
    %v1314 = vand.u32 %v120, 4294901760
    %v1315 = vsub.f32 %v120, %v1314
    %v1316 = vand.u32 %v1315, 4294901760
    %v1317 = vsub.f32 %v1315, %v1316
    %v1318 = vand.u32 %v1317, 4294901760
    %1319 = vmatpush.msra.mxu0 %v1318
    %v1320 = vand.u32 %v119, 4294901760
    %v1321 = vsub.f32 %v119, %v1320
    %v1322 = vand.u32 %v1321, 4294901760
    %v1323 = vsub.f32 %v1321, %v1322
    %v1324 = vand.u32 %v1323, 4294901760
    %1325 = vmatpush.msra.mxu0 %v1324
    %v1326 = vand.u32 %v118, 4294901760
    %v1327 = vsub.f32 %v118, %v1326
    %v1328 = vand.u32 %v1327, 4294901760
    %v1329 = vsub.f32 %v1327, %v1328
    %v1330 = vand.u32 %v1329, 4294901760
    %1331 = vmatpush.msra.mxu0 %v1330
    %v1332 = vand.u32 %v117, 4294901760
    %v1333 = vsub.f32 %v117, %v1332
    %v1334 = vand.u32 %v1333, 4294901760
    %v1335 = vsub.f32 %v1333, %v1334
    %v1336 = vand.u32 %v1335, 4294901760
    %1337 = vmatpush.msra.mxu0 %v1336
    %v1338 = vand.u32 %v116, 4294901760
    %v1339 = vsub.f32 %v116, %v1338
    %v1340 = vand.u32 %v1339, 4294901760
    %v1341 = vsub.f32 %v1339, %v1340
    %v1342 = vand.u32 %v1341, 4294901760
    %1343 = vmatpush.msra.mxu0 %v1342
    %v1344 = vand.u32 %v115, 4294901760
    %v1345 = vsub.f32 %v115, %v1344
    %v1346 = vand.u32 %v1345, 4294901760
    %v1347 = vsub.f32 %v1345, %v1346
    %v1348 = vand.u32 %v1347, 4294901760
    %1349 = vmatpush.msra.mxu0 %v1348
    %v1350 = vand.u32 %v114, 4294901760
    %v1351 = vsub.f32 %v114, %v1350
    %v1352 = vand.u32 %v1351, 4294901760
    %v1353 = vsub.f32 %v1351, %v1352
    %v1354 = vand.u32 %v1353, 4294901760
    %1355 = vmatpush.msra.mxu0 %v1354
    %v1356 = vand.u32 %v61, 4294901760
    %1357 = vmatmul.f32.gmra.mxu0 %v1356
    %v1358 = vpop.f32.mrf.mxu0
    %v1359 = vadd.f32 %v1258, %v1358
    %1360 = vdwg.mxu0
    %v1361 = vand.u32 %v129, 4294901760
    %v1362 = vsub.f32 %v129, %v1361
    %1363 = vmatpush.msra.mxu0 %v1362
    %v1364 = vand.u32 %v128, 4294901760
    %v1365 = vsub.f32 %v128, %v1364
    %1366 = vmatpush.msra.mxu0 %v1365
    %v1367 = vand.u32 %v127, 4294901760
    %v1368 = vsub.f32 %v127, %v1367
    %1369 = vmatpush.msra.mxu0 %v1368
    %v1370 = vand.u32 %v126, 4294901760
    %v1371 = vsub.f32 %v126, %v1370
    %1372 = vmatpush.msra.mxu0 %v1371
    %v1373 = vand.u32 %v125, 4294901760
    %v1374 = vsub.f32 %v125, %v1373
    %1375 = vmatpush.msra.mxu0 %v1374
    %v1376 = vand.u32 %v124, 4294901760
    %v1377 = vsub.f32 %v124, %v1376
    %1378 = vmatpush.msra.mxu0 %v1377
    %v1379 = vand.u32 %v123, 4294901760
    %v1380 = vsub.f32 %v123, %v1379
    %1381 = vmatpush.msra.mxu0 %v1380
    %v1382 = vand.u32 %v122, 4294901760
    %v1383 = vsub.f32 %v122, %v1382
    %1384 = vmatpush.msra.mxu0 %v1383
    %v1385 = vand.u32 %v121, 4294901760
    %v1386 = vsub.f32 %v121, %v1385
    %1387 = vmatpush.msra.mxu0 %v1386
    %v1388 = vand.u32 %v120, 4294901760
    %v1389 = vsub.f32 %v120, %v1388
    %1390 = vmatpush.msra.mxu0 %v1389
    %v1391 = vand.u32 %v119, 4294901760
    %v1392 = vsub.f32 %v119, %v1391
    %1393 = vmatpush.msra.mxu0 %v1392
    %v1394 = vand.u32 %v118, 4294901760
    %v1395 = vsub.f32 %v118, %v1394
    %1396 = vmatpush.msra.mxu0 %v1395
    %v1397 = vand.u32 %v117, 4294901760
    %v1398 = vsub.f32 %v117, %v1397
    %1399 = vmatpush.msra.mxu0 %v1398
    %v1400 = vand.u32 %v116, 4294901760
    %v1401 = vsub.f32 %v116, %v1400
    %1402 = vmatpush.msra.mxu0 %v1401
    %v1403 = vand.u32 %v115, 4294901760
    %v1404 = vsub.f32 %v115, %v1403
    %1405 = vmatpush.msra.mxu0 %v1404
    %v1406 = vand.u32 %v114, 4294901760
    %v1407 = vsub.f32 %v114, %v1406
    %1408 = vmatpush.msra.mxu0 %v1407
    %v1409 = vand.u32 %v61, 4294901760
    %v1410 = vsub.f32 %v61, %v1409
    %1411 = vmatmul.f32.gmra.mxu0 %v1410
    %v1412 = vpop.f32.mrf.mxu0
    %v1413 = vadd.f32 %v1359, %v1412
    %1414 = vdwg.mxu0
    %v1415 = vand.u32 %v129, 4294901760
    %1416 = vmatpush.msra.mxu0 %v1415
    %v1417 = vand.u32 %v128, 4294901760
    %1418 = vmatpush.msra.mxu0 %v1417
    %v1419 = vand.u32 %v127, 4294901760
    %1420 = vmatpush.msra.mxu0 %v1419
    %v1421 = vand.u32 %v126, 4294901760
    %1422 = vmatpush.msra.mxu0 %v1421
    %v1423 = vand.u32 %v125, 4294901760
    %1424 = vmatpush.msra.mxu0 %v1423
    %v1425 = vand.u32 %v124, 4294901760
    %1426 = vmatpush.msra.mxu0 %v1425
    %v1427 = vand.u32 %v123, 4294901760
    %1428 = vmatpush.msra.mxu0 %v1427
    %v1429 = vand.u32 %v122, 4294901760
    %1430 = vmatpush.msra.mxu0 %v1429
    %v1431 = vand.u32 %v121, 4294901760
    %1432 = vmatpush.msra.mxu0 %v1431
    %v1433 = vand.u32 %v120, 4294901760
    %1434 = vmatpush.msra.mxu0 %v1433
    %v1435 = vand.u32 %v119, 4294901760
    %1436 = vmatpush.msra.mxu0 %v1435
    %v1437 = vand.u32 %v118, 4294901760
    %1438 = vmatpush.msra.mxu0 %v1437
    %v1439 = vand.u32 %v117, 4294901760
    %1440 = vmatpush.msra.mxu0 %v1439
    %v1441 = vand.u32 %v116, 4294901760
    %1442 = vmatpush.msra.mxu0 %v1441
    %v1443 = vand.u32 %v115, 4294901760
    %1444 = vmatpush.msra.mxu0 %v1443
    %v1445 = vand.u32 %v114, 4294901760
    %1446 = vmatpush.msra.mxu0 %v1445
    %v1447 = vand.u32 %v61, 4294901760
    %v1448 = vsub.f32 %v61, %v1447
    %v1449 = vand.u32 %v1448, 4294901760
    %1450 = vmatmul.f32.gmra.mxu0 %v1449
    %v1451 = vpop.f32.mrf.mxu0
    %v1452 = vadd.f32 %v1413, %v1451
    %1453 = vdwg.mxu0
    %v1454 = vand.u32 %v129, 4294901760
    %v1455 = vsub.f32 %v129, %v1454
    %v1456 = vand.u32 %v1455, 4294901760
    %1457 = vmatpush.msra.mxu0 %v1456
    %v1458 = vand.u32 %v128, 4294901760
    %v1459 = vsub.f32 %v128, %v1458
    %v1460 = vand.u32 %v1459, 4294901760
    %1461 = vmatpush.msra.mxu0 %v1460
    %v1462 = vand.u32 %v127, 4294901760
    %v1463 = vsub.f32 %v127, %v1462
    %v1464 = vand.u32 %v1463, 4294901760
    %1465 = vmatpush.msra.mxu0 %v1464
    %v1466 = vand.u32 %v126, 4294901760
    %v1467 = vsub.f32 %v126, %v1466
    %v1468 = vand.u32 %v1467, 4294901760
    %1469 = vmatpush.msra.mxu0 %v1468
    %v1470 = vand.u32 %v125, 4294901760
    %v1471 = vsub.f32 %v125, %v1470
    %v1472 = vand.u32 %v1471, 4294901760
    %1473 = vmatpush.msra.mxu0 %v1472
    %v1474 = vand.u32 %v124, 4294901760
    %v1475 = vsub.f32 %v124, %v1474
    %v1476 = vand.u32 %v1475, 4294901760
    %1477 = vmatpush.msra.mxu0 %v1476
    %v1478 = vand.u32 %v123, 4294901760
    %v1479 = vsub.f32 %v123, %v1478
    %v1480 = vand.u32 %v1479, 4294901760
    %1481 = vmatpush.msra.mxu0 %v1480
    %v1482 = vand.u32 %v122, 4294901760
    %v1483 = vsub.f32 %v122, %v1482
    %v1484 = vand.u32 %v1483, 4294901760
    %1485 = vmatpush.msra.mxu0 %v1484
    %v1486 = vand.u32 %v121, 4294901760
    %v1487 = vsub.f32 %v121, %v1486
    %v1488 = vand.u32 %v1487, 4294901760
    %1489 = vmatpush.msra.mxu0 %v1488
    %v1490 = vand.u32 %v120, 4294901760
    %v1491 = vsub.f32 %v120, %v1490
    %v1492 = vand.u32 %v1491, 4294901760
    %1493 = vmatpush.msra.mxu0 %v1492
    %v1494 = vand.u32 %v119, 4294901760
    %v1495 = vsub.f32 %v119, %v1494
    %v1496 = vand.u32 %v1495, 4294901760
    %1497 = vmatpush.msra.mxu0 %v1496
    %v1498 = vand.u32 %v118, 4294901760
    %v1499 = vsub.f32 %v118, %v1498
    %v1500 = vand.u32 %v1499, 4294901760
    %1501 = vmatpush.msra.mxu0 %v1500
    %v1502 = vand.u32 %v117, 4294901760
    %v1503 = vsub.f32 %v117, %v1502
    %v1504 = vand.u32 %v1503, 4294901760
    %1505 = vmatpush.msra.mxu0 %v1504
    %v1506 = vand.u32 %v116, 4294901760
    %v1507 = vsub.f32 %v116, %v1506
    %v1508 = vand.u32 %v1507, 4294901760
    %1509 = vmatpush.msra.mxu0 %v1508
    %v1510 = vand.u32 %v115, 4294901760
    %v1511 = vsub.f32 %v115, %v1510
    %v1512 = vand.u32 %v1511, 4294901760
    %1513 = vmatpush.msra.mxu0 %v1512
    %v1514 = vand.u32 %v114, 4294901760
    %v1515 = vsub.f32 %v114, %v1514
    %v1516 = vand.u32 %v1515, 4294901760
    %1517 = vmatpush.msra.mxu0 %v1516
    %v1518 = vand.u32 %v61, 4294901760
    %1519 = vmatmul.f32.gmra.mxu0 %v1518
    %v1520 = vpop.f32.mrf.mxu0
    %v1521 = vadd.f32 %v1452, %v1520
    %1522 = vdwg.mxu0
    %v1523 = vand.u32 %v129, 4294901760
    %1524 = vmatpush.msra.mxu0 %v1523
    %v1525 = vand.u32 %v128, 4294901760
    %1526 = vmatpush.msra.mxu0 %v1525
    %v1527 = vand.u32 %v127, 4294901760
    %1528 = vmatpush.msra.mxu0 %v1527
    %v1529 = vand.u32 %v126, 4294901760
    %1530 = vmatpush.msra.mxu0 %v1529
    %v1531 = vand.u32 %v125, 4294901760
    %1532 = vmatpush.msra.mxu0 %v1531
    %v1533 = vand.u32 %v124, 4294901760
    %1534 = vmatpush.msra.mxu0 %v1533
    %v1535 = vand.u32 %v123, 4294901760
    %1536 = vmatpush.msra.mxu0 %v1535
    %v1537 = vand.u32 %v122, 4294901760
    %1538 = vmatpush.msra.mxu0 %v1537
    %v1539 = vand.u32 %v121, 4294901760
    %1540 = vmatpush.msra.mxu0 %v1539
    %v1541 = vand.u32 %v120, 4294901760
    %1542 = vmatpush.msra.mxu0 %v1541
    %v1543 = vand.u32 %v119, 4294901760
    %1544 = vmatpush.msra.mxu0 %v1543
    %v1545 = vand.u32 %v118, 4294901760
    %1546 = vmatpush.msra.mxu0 %v1545
    %v1547 = vand.u32 %v117, 4294901760
    %1548 = vmatpush.msra.mxu0 %v1547
    %v1549 = vand.u32 %v116, 4294901760
    %1550 = vmatpush.msra.mxu0 %v1549
    %v1551 = vand.u32 %v115, 4294901760
    %1552 = vmatpush.msra.mxu0 %v1551
    %v1553 = vand.u32 %v114, 4294901760
    %1554 = vmatpush.msra.mxu0 %v1553
    %v1555 = vand.u32 %v61, 4294901760
    %1556 = vmatmul.f32.gmra.mxu0 %v1555
    %v1557 = vpop.f32.mrf.mxu0
    %v1558 = vadd.f32 %v1521, %v1557
    %1559 = vdwg.mxu0
    %v1560 = vand.u32 %v145, 4294901760
    %1561 = vmatpush.msra.mxu0 %v1560
    %v1562 = vand.u32 %v144, 4294901760
    %1563 = vmatpush.msra.mxu0 %v1562
    %v1564 = vand.u32 %v143, 4294901760
    %1565 = vmatpush.msra.mxu0 %v1564
    %v1566 = vand.u32 %v142, 4294901760
    %1567 = vmatpush.msra.mxu0 %v1566
    %v1568 = vand.u32 %v141, 4294901760
    %1569 = vmatpush.msra.mxu0 %v1568
    %v1570 = vand.u32 %v140, 4294901760
    %1571 = vmatpush.msra.mxu0 %v1570
    %v1572 = vand.u32 %v139, 4294901760
    %1573 = vmatpush.msra.mxu0 %v1572
    %v1574 = vand.u32 %v138, 4294901760
    %1575 = vmatpush.msra.mxu0 %v1574
    %v1576 = vand.u32 %v137, 4294901760
    %1577 = vmatpush.msra.mxu0 %v1576
    %v1578 = vand.u32 %v136, 4294901760
    %1579 = vmatpush.msra.mxu0 %v1578
    %v1580 = vand.u32 %v135, 4294901760
    %1581 = vmatpush.msra.mxu0 %v1580
    %v1582 = vand.u32 %v134, 4294901760
    %1583 = vmatpush.msra.mxu0 %v1582
    %v1584 = vand.u32 %v133, 4294901760
    %1585 = vmatpush.msra.mxu0 %v1584
    %v1586 = vand.u32 %v132, 4294901760
    %1587 = vmatpush.msra.mxu0 %v1586
    %v1588 = vand.u32 %v131, 4294901760
    %1589 = vmatpush.msra.mxu0 %v1588
    %v1590 = vand.u32 %v130, 4294901760
    %1591 = vmatpush.msra.mxu0 %v1590
    %v1592 = vand.u32 %v62, 4294901760
    %v1593 = vsub.f32 %v62, %v1592
    %v1594 = vand.u32 %v1593, 4294901760
    %v1595 = vsub.f32 %v1593, %v1594
    %v1596 = vand.u32 %v1595, 4294901760
    %1597 = vmatmul.f32.gmra.mxu0 %v1596
    %v1598 = vpop.f32.mrf.mxu0
    %v1599 = vadd.f32 %v1558, %v1598
    %1600 = vdwg.mxu0
    %v1601 = vand.u32 %v145, 4294901760
    %v1602 = vsub.f32 %v145, %v1601
    %v1603 = vand.u32 %v1602, 4294901760
    %v1604 = vsub.f32 %v1602, %v1603
    %v1605 = vand.u32 %v1604, 4294901760
    %1606 = vmatpush.msra.mxu0 %v1605
    %v1607 = vand.u32 %v144, 4294901760
    %v1608 = vsub.f32 %v144, %v1607
    %v1609 = vand.u32 %v1608, 4294901760
    %v1610 = vsub.f32 %v1608, %v1609
    %v1611 = vand.u32 %v1610, 4294901760
    %1612 = vmatpush.msra.mxu0 %v1611
    %v1613 = vand.u32 %v143, 4294901760
    %v1614 = vsub.f32 %v143, %v1613
    %v1615 = vand.u32 %v1614, 4294901760
    %v1616 = vsub.f32 %v1614, %v1615
    %v1617 = vand.u32 %v1616, 4294901760
    %1618 = vmatpush.msra.mxu0 %v1617
    %v1619 = vand.u32 %v142, 4294901760
    %v1620 = vsub.f32 %v142, %v1619
    %v1621 = vand.u32 %v1620, 4294901760
    %v1622 = vsub.f32 %v1620, %v1621
    %v1623 = vand.u32 %v1622, 4294901760
    %1624 = vmatpush.msra.mxu0 %v1623
    %v1625 = vand.u32 %v141, 4294901760
    %v1626 = vsub.f32 %v141, %v1625
    %v1627 = vand.u32 %v1626, 4294901760
    %v1628 = vsub.f32 %v1626, %v1627
    %v1629 = vand.u32 %v1628, 4294901760
    %1630 = vmatpush.msra.mxu0 %v1629
    %v1631 = vand.u32 %v140, 4294901760
    %v1632 = vsub.f32 %v140, %v1631
    %v1633 = vand.u32 %v1632, 4294901760
    %v1634 = vsub.f32 %v1632, %v1633
    %v1635 = vand.u32 %v1634, 4294901760
    %1636 = vmatpush.msra.mxu0 %v1635
    %v1637 = vand.u32 %v139, 4294901760
    %v1638 = vsub.f32 %v139, %v1637
    %v1639 = vand.u32 %v1638, 4294901760
    %v1640 = vsub.f32 %v1638, %v1639
    %v1641 = vand.u32 %v1640, 4294901760
    %1642 = vmatpush.msra.mxu0 %v1641
    %v1643 = vand.u32 %v138, 4294901760
    %v1644 = vsub.f32 %v138, %v1643
    %v1645 = vand.u32 %v1644, 4294901760
    %v1646 = vsub.f32 %v1644, %v1645
    %v1647 = vand.u32 %v1646, 4294901760
    %1648 = vmatpush.msra.mxu0 %v1647
    %v1649 = vand.u32 %v137, 4294901760
    %v1650 = vsub.f32 %v137, %v1649
    %v1651 = vand.u32 %v1650, 4294901760
    %v1652 = vsub.f32 %v1650, %v1651
    %v1653 = vand.u32 %v1652, 4294901760
    %1654 = vmatpush.msra.mxu0 %v1653
    %v1655 = vand.u32 %v136, 4294901760
    %v1656 = vsub.f32 %v136, %v1655
    %v1657 = vand.u32 %v1656, 4294901760
    %v1658 = vsub.f32 %v1656, %v1657
    %v1659 = vand.u32 %v1658, 4294901760
    %1660 = vmatpush.msra.mxu0 %v1659
    %v1661 = vand.u32 %v135, 4294901760
    %v1662 = vsub.f32 %v135, %v1661
    %v1663 = vand.u32 %v1662, 4294901760
    %v1664 = vsub.f32 %v1662, %v1663
    %v1665 = vand.u32 %v1664, 4294901760
    %1666 = vmatpush.msra.mxu0 %v1665
    %v1667 = vand.u32 %v134, 4294901760
    %v1668 = vsub.f32 %v134, %v1667
    %v1669 = vand.u32 %v1668, 4294901760
    %v1670 = vsub.f32 %v1668, %v1669
    %v1671 = vand.u32 %v1670, 4294901760
    %1672 = vmatpush.msra.mxu0 %v1671
    %v1673 = vand.u32 %v133, 4294901760
    %v1674 = vsub.f32 %v133, %v1673
    %v1675 = vand.u32 %v1674, 4294901760
    %v1676 = vsub.f32 %v1674, %v1675
    %v1677 = vand.u32 %v1676, 4294901760
    %1678 = vmatpush.msra.mxu0 %v1677
    %v1679 = vand.u32 %v132, 4294901760
    %v1680 = vsub.f32 %v132, %v1679
    %v1681 = vand.u32 %v1680, 4294901760
    %v1682 = vsub.f32 %v1680, %v1681
    %v1683 = vand.u32 %v1682, 4294901760
    %1684 = vmatpush.msra.mxu0 %v1683
    %v1685 = vand.u32 %v131, 4294901760
    %v1686 = vsub.f32 %v131, %v1685
    %v1687 = vand.u32 %v1686, 4294901760
    %v1688 = vsub.f32 %v1686, %v1687
    %v1689 = vand.u32 %v1688, 4294901760
    %1690 = vmatpush.msra.mxu0 %v1689
    %v1691 = vand.u32 %v130, 4294901760
    %v1692 = vsub.f32 %v130, %v1691
    %v1693 = vand.u32 %v1692, 4294901760
    %v1694 = vsub.f32 %v1692, %v1693
    %v1695 = vand.u32 %v1694, 4294901760
    %1696 = vmatpush.msra.mxu0 %v1695
    %v1697 = vand.u32 %v62, 4294901760
    %1698 = vmatmul.f32.gmra.mxu0 %v1697
    %v1699 = vpop.f32.mrf.mxu0
    %v1700 = vadd.f32 %v1599, %v1699
    %1701 = vdwg.mxu0
    %v1702 = vand.u32 %v145, 4294901760
    %v1703 = vsub.f32 %v145, %v1702
    %1704 = vmatpush.msra.mxu0 %v1703
    %v1705 = vand.u32 %v144, 4294901760
    %v1706 = vsub.f32 %v144, %v1705
    %1707 = vmatpush.msra.mxu0 %v1706
    %v1708 = vand.u32 %v143, 4294901760
    %v1709 = vsub.f32 %v143, %v1708
    %1710 = vmatpush.msra.mxu0 %v1709
    %v1711 = vand.u32 %v142, 4294901760
    %v1712 = vsub.f32 %v142, %v1711
    %1713 = vmatpush.msra.mxu0 %v1712
    %v1714 = vand.u32 %v141, 4294901760
    %v1715 = vsub.f32 %v141, %v1714
    %1716 = vmatpush.msra.mxu0 %v1715
    %v1717 = vand.u32 %v140, 4294901760
    %v1718 = vsub.f32 %v140, %v1717
    %1719 = vmatpush.msra.mxu0 %v1718
    %v1720 = vand.u32 %v139, 4294901760
    %v1721 = vsub.f32 %v139, %v1720
    %1722 = vmatpush.msra.mxu0 %v1721
    %v1723 = vand.u32 %v138, 4294901760
    %v1724 = vsub.f32 %v138, %v1723
    %1725 = vmatpush.msra.mxu0 %v1724
    %v1726 = vand.u32 %v137, 4294901760
    %v1727 = vsub.f32 %v137, %v1726
    %1728 = vmatpush.msra.mxu0 %v1727
    %v1729 = vand.u32 %v136, 4294901760
    %v1730 = vsub.f32 %v136, %v1729
    %1731 = vmatpush.msra.mxu0 %v1730
    %v1732 = vand.u32 %v135, 4294901760
    %v1733 = vsub.f32 %v135, %v1732
    %1734 = vmatpush.msra.mxu0 %v1733
    %v1735 = vand.u32 %v134, 4294901760
    %v1736 = vsub.f32 %v134, %v1735
    %1737 = vmatpush.msra.mxu0 %v1736
    %v1738 = vand.u32 %v133, 4294901760
    %v1739 = vsub.f32 %v133, %v1738
    %1740 = vmatpush.msra.mxu0 %v1739
    %v1741 = vand.u32 %v132, 4294901760
    %v1742 = vsub.f32 %v132, %v1741
    %1743 = vmatpush.msra.mxu0 %v1742
    %v1744 = vand.u32 %v131, 4294901760
    %v1745 = vsub.f32 %v131, %v1744
    %1746 = vmatpush.msra.mxu0 %v1745
    %v1747 = vand.u32 %v130, 4294901760
    %v1748 = vsub.f32 %v130, %v1747
    %1749 = vmatpush.msra.mxu0 %v1748
    %v1750 = vand.u32 %v62, 4294901760
    %v1751 = vsub.f32 %v62, %v1750
    %1752 = vmatmul.f32.gmra.mxu0 %v1751
    %v1753 = vpop.f32.mrf.mxu0
    %v1754 = vadd.f32 %v1700, %v1753
    %1755 = vdwg.mxu0
    %v1756 = vand.u32 %v145, 4294901760
    %1757 = vmatpush.msra.mxu0 %v1756
    %v1758 = vand.u32 %v144, 4294901760
    %1759 = vmatpush.msra.mxu0 %v1758
    %v1760 = vand.u32 %v143, 4294901760
    %1761 = vmatpush.msra.mxu0 %v1760
    %v1762 = vand.u32 %v142, 4294901760
    %1763 = vmatpush.msra.mxu0 %v1762
    %v1764 = vand.u32 %v141, 4294901760
    %1765 = vmatpush.msra.mxu0 %v1764
    %v1766 = vand.u32 %v140, 4294901760
    %1767 = vmatpush.msra.mxu0 %v1766
    %v1768 = vand.u32 %v139, 4294901760
    %1769 = vmatpush.msra.mxu0 %v1768
    %v1770 = vand.u32 %v138, 4294901760
    %1771 = vmatpush.msra.mxu0 %v1770
    %v1772 = vand.u32 %v137, 4294901760
    %1773 = vmatpush.msra.mxu0 %v1772
    %v1774 = vand.u32 %v136, 4294901760
    %1775 = vmatpush.msra.mxu0 %v1774
    %v1776 = vand.u32 %v135, 4294901760
    %1777 = vmatpush.msra.mxu0 %v1776
    %v1778 = vand.u32 %v134, 4294901760
    %1779 = vmatpush.msra.mxu0 %v1778
    %v1780 = vand.u32 %v133, 4294901760
    %1781 = vmatpush.msra.mxu0 %v1780
    %v1782 = vand.u32 %v132, 4294901760
    %1783 = vmatpush.msra.mxu0 %v1782
    %v1784 = vand.u32 %v131, 4294901760
    %1785 = vmatpush.msra.mxu0 %v1784
    %v1786 = vand.u32 %v130, 4294901760
    %1787 = vmatpush.msra.mxu0 %v1786
    %v1788 = vand.u32 %v62, 4294901760
    %v1789 = vsub.f32 %v62, %v1788
    %v1790 = vand.u32 %v1789, 4294901760
    %1791 = vmatmul.f32.gmra.mxu0 %v1790
    %v1792 = vpop.f32.mrf.mxu0
    %v1793 = vadd.f32 %v1754, %v1792
    %1794 = vdwg.mxu0
    %v1795 = vand.u32 %v145, 4294901760
    %v1796 = vsub.f32 %v145, %v1795
    %v1797 = vand.u32 %v1796, 4294901760
    %1798 = vmatpush.msra.mxu0 %v1797
    %v1799 = vand.u32 %v144, 4294901760
    %v1800 = vsub.f32 %v144, %v1799
    %v1801 = vand.u32 %v1800, 4294901760
    %1802 = vmatpush.msra.mxu0 %v1801
    %v1803 = vand.u32 %v143, 4294901760
    %v1804 = vsub.f32 %v143, %v1803
    %v1805 = vand.u32 %v1804, 4294901760
    %1806 = vmatpush.msra.mxu0 %v1805
    %v1807 = vand.u32 %v142, 4294901760
    %v1808 = vsub.f32 %v142, %v1807
    %v1809 = vand.u32 %v1808, 4294901760
    %1810 = vmatpush.msra.mxu0 %v1809
    %v1811 = vand.u32 %v141, 4294901760
    %v1812 = vsub.f32 %v141, %v1811
    %v1813 = vand.u32 %v1812, 4294901760
    %1814 = vmatpush.msra.mxu0 %v1813
    %v1815 = vand.u32 %v140, 4294901760
    %v1816 = vsub.f32 %v140, %v1815
    %v1817 = vand.u32 %v1816, 4294901760
    %1818 = vmatpush.msra.mxu0 %v1817
    %v1819 = vand.u32 %v139, 4294901760
    %v1820 = vsub.f32 %v139, %v1819
    %v1821 = vand.u32 %v1820, 4294901760
    %1822 = vmatpush.msra.mxu0 %v1821
    %v1823 = vand.u32 %v138, 4294901760
    %v1824 = vsub.f32 %v138, %v1823
    %v1825 = vand.u32 %v1824, 4294901760
    %1826 = vmatpush.msra.mxu0 %v1825
    %v1827 = vand.u32 %v137, 4294901760
    %v1828 = vsub.f32 %v137, %v1827
    %v1829 = vand.u32 %v1828, 4294901760
    %1830 = vmatpush.msra.mxu0 %v1829
    %v1831 = vand.u32 %v136, 4294901760
    %v1832 = vsub.f32 %v136, %v1831
    %v1833 = vand.u32 %v1832, 4294901760
    %1834 = vmatpush.msra.mxu0 %v1833
    %v1835 = vand.u32 %v135, 4294901760
    %v1836 = vsub.f32 %v135, %v1835
    %v1837 = vand.u32 %v1836, 4294901760
    %1838 = vmatpush.msra.mxu0 %v1837
    %v1839 = vand.u32 %v134, 4294901760
    %v1840 = vsub.f32 %v134, %v1839
    %v1841 = vand.u32 %v1840, 4294901760
    %1842 = vmatpush.msra.mxu0 %v1841
    %v1843 = vand.u32 %v133, 4294901760
    %v1844 = vsub.f32 %v133, %v1843
    %v1845 = vand.u32 %v1844, 4294901760
    %1846 = vmatpush.msra.mxu0 %v1845
    %v1847 = vand.u32 %v132, 4294901760
    %v1848 = vsub.f32 %v132, %v1847
    %v1849 = vand.u32 %v1848, 4294901760
    %1850 = vmatpush.msra.mxu0 %v1849
    %v1851 = vand.u32 %v131, 4294901760
    %v1852 = vsub.f32 %v131, %v1851
    %v1853 = vand.u32 %v1852, 4294901760
    %1854 = vmatpush.msra.mxu0 %v1853
    %v1855 = vand.u32 %v130, 4294901760
    %v1856 = vsub.f32 %v130, %v1855
    %v1857 = vand.u32 %v1856, 4294901760
    %1858 = vmatpush.msra.mxu0 %v1857
    %v1859 = vand.u32 %v62, 4294901760
    %1860 = vmatmul.f32.gmra.mxu0 %v1859
    %v1861 = vpop.f32.mrf.mxu0
    %v1862 = vadd.f32 %v1793, %v1861
    %1863 = vdwg.mxu0
    %v1864 = vand.u32 %v145, 4294901760
    %1865 = vmatpush.msra.mxu0 %v1864
    %v1866 = vand.u32 %v144, 4294901760
    %1867 = vmatpush.msra.mxu0 %v1866
    %v1868 = vand.u32 %v143, 4294901760
    %1869 = vmatpush.msra.mxu0 %v1868
    %v1870 = vand.u32 %v142, 4294901760
    %1871 = vmatpush.msra.mxu0 %v1870
    %v1872 = vand.u32 %v141, 4294901760
    %1873 = vmatpush.msra.mxu0 %v1872
    %v1874 = vand.u32 %v140, 4294901760
    %1875 = vmatpush.msra.mxu0 %v1874
    %v1876 = vand.u32 %v139, 4294901760
    %1877 = vmatpush.msra.mxu0 %v1876
    %v1878 = vand.u32 %v138, 4294901760
    %1879 = vmatpush.msra.mxu0 %v1878
    %v1880 = vand.u32 %v137, 4294901760
    %1881 = vmatpush.msra.mxu0 %v1880
    %v1882 = vand.u32 %v136, 4294901760
    %1883 = vmatpush.msra.mxu0 %v1882
    %v1884 = vand.u32 %v135, 4294901760
    %1885 = vmatpush.msra.mxu0 %v1884
    %v1886 = vand.u32 %v134, 4294901760
    %1887 = vmatpush.msra.mxu0 %v1886
    %v1888 = vand.u32 %v133, 4294901760
    %1889 = vmatpush.msra.mxu0 %v1888
    %v1890 = vand.u32 %v132, 4294901760
    %1891 = vmatpush.msra.mxu0 %v1890
    %v1892 = vand.u32 %v131, 4294901760
    %1893 = vmatpush.msra.mxu0 %v1892
    %v1894 = vand.u32 %v130, 4294901760
    %1895 = vmatpush.msra.mxu0 %v1894
    %v1896 = vand.u32 %v62, 4294901760
    %1897 = vmatmul.f32.gmra.mxu0 %v1896
    %v1898 = vpop.f32.mrf.mxu0
    %v1899 = vadd.f32 %v1862, %v1898
    %1900 = vdwg.mxu0
    %v1901 = vand.u32 %v161, 4294901760
    %1902 = vmatpush.msra.mxu0 %v1901
    %v1903 = vand.u32 %v160, 4294901760
    %1904 = vmatpush.msra.mxu0 %v1903
    %v1905 = vand.u32 %v159, 4294901760
    %1906 = vmatpush.msra.mxu0 %v1905
    %v1907 = vand.u32 %v158, 4294901760
    %1908 = vmatpush.msra.mxu0 %v1907
    %v1909 = vand.u32 %v157, 4294901760
    %1910 = vmatpush.msra.mxu0 %v1909
    %v1911 = vand.u32 %v156, 4294901760
    %1912 = vmatpush.msra.mxu0 %v1911
    %v1913 = vand.u32 %v155, 4294901760
    %1914 = vmatpush.msra.mxu0 %v1913
    %v1915 = vand.u32 %v154, 4294901760
    %1916 = vmatpush.msra.mxu0 %v1915
    %v1917 = vand.u32 %v153, 4294901760
    %1918 = vmatpush.msra.mxu0 %v1917
    %v1919 = vand.u32 %v152, 4294901760
    %1920 = vmatpush.msra.mxu0 %v1919
    %v1921 = vand.u32 %v151, 4294901760
    %1922 = vmatpush.msra.mxu0 %v1921
    %v1923 = vand.u32 %v150, 4294901760
    %1924 = vmatpush.msra.mxu0 %v1923
    %v1925 = vand.u32 %v149, 4294901760
    %1926 = vmatpush.msra.mxu0 %v1925
    %v1927 = vand.u32 %v148, 4294901760
    %1928 = vmatpush.msra.mxu0 %v1927
    %v1929 = vand.u32 %v147, 4294901760
    %1930 = vmatpush.msra.mxu0 %v1929
    %v1931 = vand.u32 %v146, 4294901760
    %1932 = vmatpush.msra.mxu0 %v1931
    %v1933 = vand.u32 %v63, 4294901760
    %v1934 = vsub.f32 %v63, %v1933
    %v1935 = vand.u32 %v1934, 4294901760
    %v1936 = vsub.f32 %v1934, %v1935
    %v1937 = vand.u32 %v1936, 4294901760
    %1938 = vmatmul.f32.gmra.mxu0 %v1937
    %v1939 = vpop.f32.mrf.mxu0
    %v1940 = vadd.f32 %v1899, %v1939
    %1941 = vdwg.mxu0
    %v1942 = vand.u32 %v161, 4294901760
    %v1943 = vsub.f32 %v161, %v1942
    %v1944 = vand.u32 %v1943, 4294901760
    %v1945 = vsub.f32 %v1943, %v1944
    %v1946 = vand.u32 %v1945, 4294901760
    %1947 = vmatpush.msra.mxu0 %v1946
    %v1948 = vand.u32 %v160, 4294901760
    %v1949 = vsub.f32 %v160, %v1948
    %v1950 = vand.u32 %v1949, 4294901760
    %v1951 = vsub.f32 %v1949, %v1950
    %v1952 = vand.u32 %v1951, 4294901760
    %1953 = vmatpush.msra.mxu0 %v1952
    %v1954 = vand.u32 %v159, 4294901760
    %v1955 = vsub.f32 %v159, %v1954
    %v1956 = vand.u32 %v1955, 4294901760
    %v1957 = vsub.f32 %v1955, %v1956
    %v1958 = vand.u32 %v1957, 4294901760
    %1959 = vmatpush.msra.mxu0 %v1958
    %v1960 = vand.u32 %v158, 4294901760
    %v1961 = vsub.f32 %v158, %v1960
    %v1962 = vand.u32 %v1961, 4294901760
    %v1963 = vsub.f32 %v1961, %v1962
    %v1964 = vand.u32 %v1963, 4294901760
    %1965 = vmatpush.msra.mxu0 %v1964
    %v1966 = vand.u32 %v157, 4294901760
    %v1967 = vsub.f32 %v157, %v1966
    %v1968 = vand.u32 %v1967, 4294901760
    %v1969 = vsub.f32 %v1967, %v1968
    %v1970 = vand.u32 %v1969, 4294901760
    %1971 = vmatpush.msra.mxu0 %v1970
    %v1972 = vand.u32 %v156, 4294901760
    %v1973 = vsub.f32 %v156, %v1972
    %v1974 = vand.u32 %v1973, 4294901760
    %v1975 = vsub.f32 %v1973, %v1974
    %v1976 = vand.u32 %v1975, 4294901760
    %1977 = vmatpush.msra.mxu0 %v1976
    %v1978 = vand.u32 %v155, 4294901760
    %v1979 = vsub.f32 %v155, %v1978
    %v1980 = vand.u32 %v1979, 4294901760
    %v1981 = vsub.f32 %v1979, %v1980
    %v1982 = vand.u32 %v1981, 4294901760
    %1983 = vmatpush.msra.mxu0 %v1982
    %v1984 = vand.u32 %v154, 4294901760
    %v1985 = vsub.f32 %v154, %v1984
    %v1986 = vand.u32 %v1985, 4294901760
    %v1987 = vsub.f32 %v1985, %v1986
    %v1988 = vand.u32 %v1987, 4294901760
    %1989 = vmatpush.msra.mxu0 %v1988
    %v1990 = vand.u32 %v153, 4294901760
    %v1991 = vsub.f32 %v153, %v1990
    %v1992 = vand.u32 %v1991, 4294901760
    %v1993 = vsub.f32 %v1991, %v1992
    %v1994 = vand.u32 %v1993, 4294901760
    %1995 = vmatpush.msra.mxu0 %v1994
    %v1996 = vand.u32 %v152, 4294901760
    %v1997 = vsub.f32 %v152, %v1996
    %v1998 = vand.u32 %v1997, 4294901760
    %v1999 = vsub.f32 %v1997, %v1998
    %v2000 = vand.u32 %v1999, 4294901760
    %2001 = vmatpush.msra.mxu0 %v2000
    %v2002 = vand.u32 %v151, 4294901760
    %v2003 = vsub.f32 %v151, %v2002
    %v2004 = vand.u32 %v2003, 4294901760
    %v2005 = vsub.f32 %v2003, %v2004
    %v2006 = vand.u32 %v2005, 4294901760
    %2007 = vmatpush.msra.mxu0 %v2006
    %v2008 = vand.u32 %v150, 4294901760
    %v2009 = vsub.f32 %v150, %v2008
    %v2010 = vand.u32 %v2009, 4294901760
    %v2011 = vsub.f32 %v2009, %v2010
    %v2012 = vand.u32 %v2011, 4294901760
    %2013 = vmatpush.msra.mxu0 %v2012
    %v2014 = vand.u32 %v149, 4294901760
    %v2015 = vsub.f32 %v149, %v2014
    %v2016 = vand.u32 %v2015, 4294901760
    %v2017 = vsub.f32 %v2015, %v2016
    %v2018 = vand.u32 %v2017, 4294901760
    %2019 = vmatpush.msra.mxu0 %v2018
    %v2020 = vand.u32 %v148, 4294901760
    %v2021 = vsub.f32 %v148, %v2020
    %v2022 = vand.u32 %v2021, 4294901760
    %v2023 = vsub.f32 %v2021, %v2022
    %v2024 = vand.u32 %v2023, 4294901760
    %2025 = vmatpush.msra.mxu0 %v2024
    %v2026 = vand.u32 %v147, 4294901760
    %v2027 = vsub.f32 %v147, %v2026
    %v2028 = vand.u32 %v2027, 4294901760
    %v2029 = vsub.f32 %v2027, %v2028
    %v2030 = vand.u32 %v2029, 4294901760
    %2031 = vmatpush.msra.mxu0 %v2030
    %v2032 = vand.u32 %v146, 4294901760
    %v2033 = vsub.f32 %v146, %v2032
    %v2034 = vand.u32 %v2033, 4294901760
    %v2035 = vsub.f32 %v2033, %v2034
    %v2036 = vand.u32 %v2035, 4294901760
    %2037 = vmatpush.msra.mxu0 %v2036
    %v2038 = vand.u32 %v63, 4294901760
    %2039 = vmatmul.f32.gmra.mxu0 %v2038
    %v2040 = vpop.f32.mrf.mxu0
    %v2041 = vadd.f32 %v1940, %v2040
    %2042 = vdwg.mxu0
    %v2043 = vand.u32 %v161, 4294901760
    %v2044 = vsub.f32 %v161, %v2043
    %2045 = vmatpush.msra.mxu0 %v2044
    %v2046 = vand.u32 %v160, 4294901760
    %v2047 = vsub.f32 %v160, %v2046
    %2048 = vmatpush.msra.mxu0 %v2047
    %v2049 = vand.u32 %v159, 4294901760
    %v2050 = vsub.f32 %v159, %v2049
    %2051 = vmatpush.msra.mxu0 %v2050
    %v2052 = vand.u32 %v158, 4294901760
    %v2053 = vsub.f32 %v158, %v2052
    %2054 = vmatpush.msra.mxu0 %v2053
    %v2055 = vand.u32 %v157, 4294901760
    %v2056 = vsub.f32 %v157, %v2055
    %2057 = vmatpush.msra.mxu0 %v2056
    %v2058 = vand.u32 %v156, 4294901760
    %v2059 = vsub.f32 %v156, %v2058
    %2060 = vmatpush.msra.mxu0 %v2059
    %v2061 = vand.u32 %v155, 4294901760
    %v2062 = vsub.f32 %v155, %v2061
    %2063 = vmatpush.msra.mxu0 %v2062
    %v2064 = vand.u32 %v154, 4294901760
    %v2065 = vsub.f32 %v154, %v2064
    %2066 = vmatpush.msra.mxu0 %v2065
    %v2067 = vand.u32 %v153, 4294901760
    %v2068 = vsub.f32 %v153, %v2067
    %2069 = vmatpush.msra.mxu0 %v2068
    %v2070 = vand.u32 %v152, 4294901760
    %v2071 = vsub.f32 %v152, %v2070
    %2072 = vmatpush.msra.mxu0 %v2071
    %v2073 = vand.u32 %v151, 4294901760
    %v2074 = vsub.f32 %v151, %v2073
    %2075 = vmatpush.msra.mxu0 %v2074
    %v2076 = vand.u32 %v150, 4294901760
    %v2077 = vsub.f32 %v150, %v2076
    %2078 = vmatpush.msra.mxu0 %v2077
    %v2079 = vand.u32 %v149, 4294901760
    %v2080 = vsub.f32 %v149, %v2079
    %2081 = vmatpush.msra.mxu0 %v2080
    %v2082 = vand.u32 %v148, 4294901760
    %v2083 = vsub.f32 %v148, %v2082
    %2084 = vmatpush.msra.mxu0 %v2083
    %v2085 = vand.u32 %v147, 4294901760
    %v2086 = vsub.f32 %v147, %v2085
    %2087 = vmatpush.msra.mxu0 %v2086
    %v2088 = vand.u32 %v146, 4294901760
    %v2089 = vsub.f32 %v146, %v2088
    %2090 = vmatpush.msra.mxu0 %v2089
    %v2091 = vand.u32 %v63, 4294901760
    %v2092 = vsub.f32 %v63, %v2091
    %2093 = vmatmul.f32.gmra.mxu0 %v2092
    %v2094 = vpop.f32.mrf.mxu0
    %v2095 = vadd.f32 %v2041, %v2094
    %2096 = vdwg.mxu0
    %v2097 = vand.u32 %v161, 4294901760
    %2098 = vmatpush.msra.mxu0 %v2097
    %v2099 = vand.u32 %v160, 4294901760
    %2100 = vmatpush.msra.mxu0 %v2099
    %v2101 = vand.u32 %v159, 4294901760
    %2102 = vmatpush.msra.mxu0 %v2101
    %v2103 = vand.u32 %v158, 4294901760
    %2104 = vmatpush.msra.mxu0 %v2103
    %v2105 = vand.u32 %v157, 4294901760
    %2106 = vmatpush.msra.mxu0 %v2105
    %v2107 = vand.u32 %v156, 4294901760
    %2108 = vmatpush.msra.mxu0 %v2107
    %v2109 = vand.u32 %v155, 4294901760
    %2110 = vmatpush.msra.mxu0 %v2109
    %v2111 = vand.u32 %v154, 4294901760
    %2112 = vmatpush.msra.mxu0 %v2111
    %v2113 = vand.u32 %v153, 4294901760
    %2114 = vmatpush.msra.mxu0 %v2113
    %v2115 = vand.u32 %v152, 4294901760
    %2116 = vmatpush.msra.mxu0 %v2115
    %v2117 = vand.u32 %v151, 4294901760
    %2118 = vmatpush.msra.mxu0 %v2117
    %v2119 = vand.u32 %v150, 4294901760
    %2120 = vmatpush.msra.mxu0 %v2119
    %v2121 = vand.u32 %v149, 4294901760
    %2122 = vmatpush.msra.mxu0 %v2121
    %v2123 = vand.u32 %v148, 4294901760
    %2124 = vmatpush.msra.mxu0 %v2123
    %v2125 = vand.u32 %v147, 4294901760
    %2126 = vmatpush.msra.mxu0 %v2125
    %v2127 = vand.u32 %v146, 4294901760
    %2128 = vmatpush.msra.mxu0 %v2127
    %v2129 = vand.u32 %v63, 4294901760
    %v2130 = vsub.f32 %v63, %v2129
    %v2131 = vand.u32 %v2130, 4294901760
    %2132 = vmatmul.f32.gmra.mxu0 %v2131
    %v2133 = vpop.f32.mrf.mxu0
    %v2134 = vadd.f32 %v2095, %v2133
    %2135 = vdwg.mxu0
    %v2136 = vand.u32 %v161, 4294901760
    %v2137 = vsub.f32 %v161, %v2136
    %v2138 = vand.u32 %v2137, 4294901760
    %2139 = vmatpush.msra.mxu0 %v2138
    %v2140 = vand.u32 %v160, 4294901760
    %v2141 = vsub.f32 %v160, %v2140
    %v2142 = vand.u32 %v2141, 4294901760
    %2143 = vmatpush.msra.mxu0 %v2142
    %v2144 = vand.u32 %v159, 4294901760
    %v2145 = vsub.f32 %v159, %v2144
    %v2146 = vand.u32 %v2145, 4294901760
    %2147 = vmatpush.msra.mxu0 %v2146
    %v2148 = vand.u32 %v158, 4294901760
    %v2149 = vsub.f32 %v158, %v2148
    %v2150 = vand.u32 %v2149, 4294901760
    %2151 = vmatpush.msra.mxu0 %v2150
    %v2152 = vand.u32 %v157, 4294901760
    %v2153 = vsub.f32 %v157, %v2152
    %v2154 = vand.u32 %v2153, 4294901760
    %2155 = vmatpush.msra.mxu0 %v2154
    %v2156 = vand.u32 %v156, 4294901760
    %v2157 = vsub.f32 %v156, %v2156
    %v2158 = vand.u32 %v2157, 4294901760
    %2159 = vmatpush.msra.mxu0 %v2158
    %v2160 = vand.u32 %v155, 4294901760
    %v2161 = vsub.f32 %v155, %v2160
    %v2162 = vand.u32 %v2161, 4294901760
    %2163 = vmatpush.msra.mxu0 %v2162
    %v2164 = vand.u32 %v154, 4294901760
    %v2165 = vsub.f32 %v154, %v2164
    %v2166 = vand.u32 %v2165, 4294901760
    %2167 = vmatpush.msra.mxu0 %v2166
    %v2168 = vand.u32 %v153, 4294901760
    %v2169 = vsub.f32 %v153, %v2168
    %v2170 = vand.u32 %v2169, 4294901760
    %2171 = vmatpush.msra.mxu0 %v2170
    %v2172 = vand.u32 %v152, 4294901760
    %v2173 = vsub.f32 %v152, %v2172
    %v2174 = vand.u32 %v2173, 4294901760
    %2175 = vmatpush.msra.mxu0 %v2174
    %v2176 = vand.u32 %v151, 4294901760
    %v2177 = vsub.f32 %v151, %v2176
    %v2178 = vand.u32 %v2177, 4294901760
    %2179 = vmatpush.msra.mxu0 %v2178
    %v2180 = vand.u32 %v150, 4294901760
    %v2181 = vsub.f32 %v150, %v2180
    %v2182 = vand.u32 %v2181, 4294901760
    %2183 = vmatpush.msra.mxu0 %v2182
    %v2184 = vand.u32 %v149, 4294901760
    %v2185 = vsub.f32 %v149, %v2184
    %v2186 = vand.u32 %v2185, 4294901760
    %2187 = vmatpush.msra.mxu0 %v2186
    %v2188 = vand.u32 %v148, 4294901760
    %v2189 = vsub.f32 %v148, %v2188
    %v2190 = vand.u32 %v2189, 4294901760
    %2191 = vmatpush.msra.mxu0 %v2190
    %v2192 = vand.u32 %v147, 4294901760
    %v2193 = vsub.f32 %v147, %v2192
    %v2194 = vand.u32 %v2193, 4294901760
    %2195 = vmatpush.msra.mxu0 %v2194
    %v2196 = vand.u32 %v146, 4294901760
    %v2197 = vsub.f32 %v146, %v2196
    %v2198 = vand.u32 %v2197, 4294901760
    %2199 = vmatpush.msra.mxu0 %v2198
    %v2200 = vand.u32 %v63, 4294901760
    %2201 = vmatmul.f32.gmra.mxu0 %v2200
    %v2202 = vpop.f32.mrf.mxu0
    %v2203 = vadd.f32 %v2134, %v2202
    %2204 = vdwg.mxu0
    %v2205 = vand.u32 %v161, 4294901760
    %2206 = vmatpush.msra.mxu0 %v2205
    %v2207 = vand.u32 %v160, 4294901760
    %2208 = vmatpush.msra.mxu0 %v2207
    %v2209 = vand.u32 %v159, 4294901760
    %2210 = vmatpush.msra.mxu0 %v2209
    %v2211 = vand.u32 %v158, 4294901760
    %2212 = vmatpush.msra.mxu0 %v2211
    %v2213 = vand.u32 %v157, 4294901760
    %2214 = vmatpush.msra.mxu0 %v2213
    %v2215 = vand.u32 %v156, 4294901760
    %2216 = vmatpush.msra.mxu0 %v2215
    %v2217 = vand.u32 %v155, 4294901760
    %2218 = vmatpush.msra.mxu0 %v2217
    %v2219 = vand.u32 %v154, 4294901760
    %2220 = vmatpush.msra.mxu0 %v2219
    %v2221 = vand.u32 %v153, 4294901760
    %2222 = vmatpush.msra.mxu0 %v2221
    %v2223 = vand.u32 %v152, 4294901760
    %2224 = vmatpush.msra.mxu0 %v2223
    %v2225 = vand.u32 %v151, 4294901760
    %2226 = vmatpush.msra.mxu0 %v2225
    %v2227 = vand.u32 %v150, 4294901760
    %2228 = vmatpush.msra.mxu0 %v2227
    %v2229 = vand.u32 %v149, 4294901760
    %2230 = vmatpush.msra.mxu0 %v2229
    %v2231 = vand.u32 %v148, 4294901760
    %2232 = vmatpush.msra.mxu0 %v2231
    %v2233 = vand.u32 %v147, 4294901760
    %2234 = vmatpush.msra.mxu0 %v2233
    %v2235 = vand.u32 %v146, 4294901760
    %2236 = vmatpush.msra.mxu0 %v2235
    %v2237 = vand.u32 %v63, 4294901760
    %2238 = vmatmul.f32.gmra.mxu0 %v2237
    %v2239 = vpop.f32.mrf.mxu0
    %v2240 = vadd.f32 %v2203, %v2239
    %2241 = vdwg.mxu0
    %v2242 = vand.u32 %v177, 4294901760
    %2243 = vmatpush.msra.mxu0 %v2242
    %v2244 = vand.u32 %v176, 4294901760
    %2245 = vmatpush.msra.mxu0 %v2244
    %v2246 = vand.u32 %v175, 4294901760
    %2247 = vmatpush.msra.mxu0 %v2246
    %v2248 = vand.u32 %v174, 4294901760
    %2249 = vmatpush.msra.mxu0 %v2248
    %v2250 = vand.u32 %v173, 4294901760
    %2251 = vmatpush.msra.mxu0 %v2250
    %v2252 = vand.u32 %v172, 4294901760
    %2253 = vmatpush.msra.mxu0 %v2252
    %v2254 = vand.u32 %v171, 4294901760
    %2255 = vmatpush.msra.mxu0 %v2254
    %v2256 = vand.u32 %v170, 4294901760
    %2257 = vmatpush.msra.mxu0 %v2256
    %v2258 = vand.u32 %v169, 4294901760
    %2259 = vmatpush.msra.mxu0 %v2258
    %v2260 = vand.u32 %v168, 4294901760
    %2261 = vmatpush.msra.mxu0 %v2260
    %v2262 = vand.u32 %v167, 4294901760
    %2263 = vmatpush.msra.mxu0 %v2262
    %v2264 = vand.u32 %v166, 4294901760
    %2265 = vmatpush.msra.mxu0 %v2264
    %v2266 = vand.u32 %v165, 4294901760
    %2267 = vmatpush.msra.mxu0 %v2266
    %v2268 = vand.u32 %v164, 4294901760
    %2269 = vmatpush.msra.mxu0 %v2268
    %v2270 = vand.u32 %v163, 4294901760
    %2271 = vmatpush.msra.mxu0 %v2270
    %v2272 = vand.u32 %v162, 4294901760
    %2273 = vmatpush.msra.mxu0 %v2272
    %v2274 = vand.u32 %v64, 4294901760
    %v2275 = vsub.f32 %v64, %v2274
    %v2276 = vand.u32 %v2275, 4294901760
    %v2277 = vsub.f32 %v2275, %v2276
    %v2278 = vand.u32 %v2277, 4294901760
    %2279 = vmatmul.f32.gmra.mxu0 %v2278
    %v2280 = vpop.f32.mrf.mxu0
    %v2281 = vadd.f32 %v2240, %v2280
    %2282 = vdwg.mxu0
    %v2283 = vand.u32 %v177, 4294901760
    %v2284 = vsub.f32 %v177, %v2283
    %v2285 = vand.u32 %v2284, 4294901760
    %v2286 = vsub.f32 %v2284, %v2285
    %v2287 = vand.u32 %v2286, 4294901760
    %2288 = vmatpush.msra.mxu0 %v2287
    %v2289 = vand.u32 %v176, 4294901760
    %v2290 = vsub.f32 %v176, %v2289
    %v2291 = vand.u32 %v2290, 4294901760
    %v2292 = vsub.f32 %v2290, %v2291
    %v2293 = vand.u32 %v2292, 4294901760
    %2294 = vmatpush.msra.mxu0 %v2293
    %v2295 = vand.u32 %v175, 4294901760
    %v2296 = vsub.f32 %v175, %v2295
    %v2297 = vand.u32 %v2296, 4294901760
    %v2298 = vsub.f32 %v2296, %v2297
    %v2299 = vand.u32 %v2298, 4294901760
    %2300 = vmatpush.msra.mxu0 %v2299
    %v2301 = vand.u32 %v174, 4294901760
    %v2302 = vsub.f32 %v174, %v2301
    %v2303 = vand.u32 %v2302, 4294901760
    %v2304 = vsub.f32 %v2302, %v2303
    %v2305 = vand.u32 %v2304, 4294901760
    %2306 = vmatpush.msra.mxu0 %v2305
    %v2307 = vand.u32 %v173, 4294901760
    %v2308 = vsub.f32 %v173, %v2307
    %v2309 = vand.u32 %v2308, 4294901760
    %v2310 = vsub.f32 %v2308, %v2309
    %v2311 = vand.u32 %v2310, 4294901760
    %2312 = vmatpush.msra.mxu0 %v2311
    %v2313 = vand.u32 %v172, 4294901760
    %v2314 = vsub.f32 %v172, %v2313
    %v2315 = vand.u32 %v2314, 4294901760
    %v2316 = vsub.f32 %v2314, %v2315
    %v2317 = vand.u32 %v2316, 4294901760
    %2318 = vmatpush.msra.mxu0 %v2317
    %v2319 = vand.u32 %v171, 4294901760
    %v2320 = vsub.f32 %v171, %v2319
    %v2321 = vand.u32 %v2320, 4294901760
    %v2322 = vsub.f32 %v2320, %v2321
    %v2323 = vand.u32 %v2322, 4294901760
    %2324 = vmatpush.msra.mxu0 %v2323
    %v2325 = vand.u32 %v170, 4294901760
    %v2326 = vsub.f32 %v170, %v2325
    %v2327 = vand.u32 %v2326, 4294901760
    %v2328 = vsub.f32 %v2326, %v2327
    %v2329 = vand.u32 %v2328, 4294901760
    %2330 = vmatpush.msra.mxu0 %v2329
    %v2331 = vand.u32 %v169, 4294901760
    %v2332 = vsub.f32 %v169, %v2331
    %v2333 = vand.u32 %v2332, 4294901760
    %v2334 = vsub.f32 %v2332, %v2333
    %v2335 = vand.u32 %v2334, 4294901760
    %2336 = vmatpush.msra.mxu0 %v2335
    %v2337 = vand.u32 %v168, 4294901760
    %v2338 = vsub.f32 %v168, %v2337
    %v2339 = vand.u32 %v2338, 4294901760
    %v2340 = vsub.f32 %v2338, %v2339
    %v2341 = vand.u32 %v2340, 4294901760
    %2342 = vmatpush.msra.mxu0 %v2341
    %v2343 = vand.u32 %v167, 4294901760
    %v2344 = vsub.f32 %v167, %v2343
    %v2345 = vand.u32 %v2344, 4294901760
    %v2346 = vsub.f32 %v2344, %v2345
    %v2347 = vand.u32 %v2346, 4294901760
    %2348 = vmatpush.msra.mxu0 %v2347
    %v2349 = vand.u32 %v166, 4294901760
    %v2350 = vsub.f32 %v166, %v2349
    %v2351 = vand.u32 %v2350, 4294901760
    %v2352 = vsub.f32 %v2350, %v2351
    %v2353 = vand.u32 %v2352, 4294901760
    %2354 = vmatpush.msra.mxu0 %v2353
    %v2355 = vand.u32 %v165, 4294901760
    %v2356 = vsub.f32 %v165, %v2355
    %v2357 = vand.u32 %v2356, 4294901760
    %v2358 = vsub.f32 %v2356, %v2357
    %v2359 = vand.u32 %v2358, 4294901760
    %2360 = vmatpush.msra.mxu0 %v2359
    %v2361 = vand.u32 %v164, 4294901760
    %v2362 = vsub.f32 %v164, %v2361
    %v2363 = vand.u32 %v2362, 4294901760
    %v2364 = vsub.f32 %v2362, %v2363
    %v2365 = vand.u32 %v2364, 4294901760
    %2366 = vmatpush.msra.mxu0 %v2365
    %v2367 = vand.u32 %v163, 4294901760
    %v2368 = vsub.f32 %v163, %v2367
    %v2369 = vand.u32 %v2368, 4294901760
    %v2370 = vsub.f32 %v2368, %v2369
    %v2371 = vand.u32 %v2370, 4294901760
    %2372 = vmatpush.msra.mxu0 %v2371
    %v2373 = vand.u32 %v162, 4294901760
    %v2374 = vsub.f32 %v162, %v2373
    %v2375 = vand.u32 %v2374, 4294901760
    %v2376 = vsub.f32 %v2374, %v2375
    %v2377 = vand.u32 %v2376, 4294901760
    %2378 = vmatpush.msra.mxu0 %v2377
    %v2379 = vand.u32 %v64, 4294901760
    %2380 = vmatmul.f32.gmra.mxu0 %v2379
    %v2381 = vpop.f32.mrf.mxu0
    %v2382 = vadd.f32 %v2281, %v2381
    %2383 = vdwg.mxu0
    %v2384 = vand.u32 %v177, 4294901760
    %v2385 = vsub.f32 %v177, %v2384
    %2386 = vmatpush.msra.mxu0 %v2385
    %v2387 = vand.u32 %v176, 4294901760
    %v2388 = vsub.f32 %v176, %v2387
    %2389 = vmatpush.msra.mxu0 %v2388
    %v2390 = vand.u32 %v175, 4294901760
    %v2391 = vsub.f32 %v175, %v2390
    %2392 = vmatpush.msra.mxu0 %v2391
    %v2393 = vand.u32 %v174, 4294901760
    %v2394 = vsub.f32 %v174, %v2393
    %2395 = vmatpush.msra.mxu0 %v2394
    %v2396 = vand.u32 %v173, 4294901760
    %v2397 = vsub.f32 %v173, %v2396
    %2398 = vmatpush.msra.mxu0 %v2397
    %v2399 = vand.u32 %v172, 4294901760
    %v2400 = vsub.f32 %v172, %v2399
    %2401 = vmatpush.msra.mxu0 %v2400
    %v2402 = vand.u32 %v171, 4294901760
    %v2403 = vsub.f32 %v171, %v2402
    %2404 = vmatpush.msra.mxu0 %v2403
    %v2405 = vand.u32 %v170, 4294901760
    %v2406 = vsub.f32 %v170, %v2405
    %2407 = vmatpush.msra.mxu0 %v2406
    %v2408 = vand.u32 %v169, 4294901760
    %v2409 = vsub.f32 %v169, %v2408
    %2410 = vmatpush.msra.mxu0 %v2409
    %v2411 = vand.u32 %v168, 4294901760
    %v2412 = vsub.f32 %v168, %v2411
    %2413 = vmatpush.msra.mxu0 %v2412
    %v2414 = vand.u32 %v167, 4294901760
    %v2415 = vsub.f32 %v167, %v2414
    %2416 = vmatpush.msra.mxu0 %v2415
    %v2417 = vand.u32 %v166, 4294901760
    %v2418 = vsub.f32 %v166, %v2417
    %2419 = vmatpush.msra.mxu0 %v2418
    %v2420 = vand.u32 %v165, 4294901760
    %v2421 = vsub.f32 %v165, %v2420
    %2422 = vmatpush.msra.mxu0 %v2421
    %v2423 = vand.u32 %v164, 4294901760
    %v2424 = vsub.f32 %v164, %v2423
    %2425 = vmatpush.msra.mxu0 %v2424
    %v2426 = vand.u32 %v163, 4294901760
    %v2427 = vsub.f32 %v163, %v2426
    %2428 = vmatpush.msra.mxu0 %v2427
    %v2429 = vand.u32 %v162, 4294901760
    %v2430 = vsub.f32 %v162, %v2429
    %2431 = vmatpush.msra.mxu0 %v2430
    %v2432 = vand.u32 %v64, 4294901760
    %v2433 = vsub.f32 %v64, %v2432
    %2434 = vmatmul.f32.gmra.mxu0 %v2433
    %v2435 = vpop.f32.mrf.mxu0
    %v2436 = vadd.f32 %v2382, %v2435
    %2437 = vdwg.mxu0
    %v2438 = vand.u32 %v177, 4294901760
    %2439 = vmatpush.msra.mxu0 %v2438
    %v2440 = vand.u32 %v176, 4294901760
    %2441 = vmatpush.msra.mxu0 %v2440
    %v2442 = vand.u32 %v175, 4294901760
    %2443 = vmatpush.msra.mxu0 %v2442
    %v2444 = vand.u32 %v174, 4294901760
    %2445 = vmatpush.msra.mxu0 %v2444
    %v2446 = vand.u32 %v173, 4294901760
    %2447 = vmatpush.msra.mxu0 %v2446
    %v2448 = vand.u32 %v172, 4294901760
    %2449 = vmatpush.msra.mxu0 %v2448
    %v2450 = vand.u32 %v171, 4294901760
    %2451 = vmatpush.msra.mxu0 %v2450
    %v2452 = vand.u32 %v170, 4294901760
    %2453 = vmatpush.msra.mxu0 %v2452
    %v2454 = vand.u32 %v169, 4294901760
    %2455 = vmatpush.msra.mxu0 %v2454
    %v2456 = vand.u32 %v168, 4294901760
    %2457 = vmatpush.msra.mxu0 %v2456
    %v2458 = vand.u32 %v167, 4294901760
    %2459 = vmatpush.msra.mxu0 %v2458
    %v2460 = vand.u32 %v166, 4294901760
    %2461 = vmatpush.msra.mxu0 %v2460
    %v2462 = vand.u32 %v165, 4294901760
    %2463 = vmatpush.msra.mxu0 %v2462
    %v2464 = vand.u32 %v164, 4294901760
    %2465 = vmatpush.msra.mxu0 %v2464
    %v2466 = vand.u32 %v163, 4294901760
    %2467 = vmatpush.msra.mxu0 %v2466
    %v2468 = vand.u32 %v162, 4294901760
    %2469 = vmatpush.msra.mxu0 %v2468
    %v2470 = vand.u32 %v64, 4294901760
    %v2471 = vsub.f32 %v64, %v2470
    %v2472 = vand.u32 %v2471, 4294901760
    %2473 = vmatmul.f32.gmra.mxu0 %v2472
    %v2474 = vpop.f32.mrf.mxu0
    %v2475 = vadd.f32 %v2436, %v2474
    %2476 = vdwg.mxu0
    %v2477 = vand.u32 %v177, 4294901760
    %v2478 = vsub.f32 %v177, %v2477
    %v2479 = vand.u32 %v2478, 4294901760
    %2480 = vmatpush.msra.mxu0 %v2479
    %v2481 = vand.u32 %v176, 4294901760
    %v2482 = vsub.f32 %v176, %v2481
    %v2483 = vand.u32 %v2482, 4294901760
    %2484 = vmatpush.msra.mxu0 %v2483
    %v2485 = vand.u32 %v175, 4294901760
    %v2486 = vsub.f32 %v175, %v2485
    %v2487 = vand.u32 %v2486, 4294901760
    %2488 = vmatpush.msra.mxu0 %v2487
    %v2489 = vand.u32 %v174, 4294901760
    %v2490 = vsub.f32 %v174, %v2489
    %v2491 = vand.u32 %v2490, 4294901760
    %2492 = vmatpush.msra.mxu0 %v2491
    %v2493 = vand.u32 %v173, 4294901760
    %v2494 = vsub.f32 %v173, %v2493
    %v2495 = vand.u32 %v2494, 4294901760
    %2496 = vmatpush.msra.mxu0 %v2495
    %v2497 = vand.u32 %v172, 4294901760
    %v2498 = vsub.f32 %v172, %v2497
    %v2499 = vand.u32 %v2498, 4294901760
    %2500 = vmatpush.msra.mxu0 %v2499
    %v2501 = vand.u32 %v171, 4294901760
    %v2502 = vsub.f32 %v171, %v2501
    %v2503 = vand.u32 %v2502, 4294901760
    %2504 = vmatpush.msra.mxu0 %v2503
    %v2505 = vand.u32 %v170, 4294901760
    %v2506 = vsub.f32 %v170, %v2505
    %v2507 = vand.u32 %v2506, 4294901760
    %2508 = vmatpush.msra.mxu0 %v2507
    %v2509 = vand.u32 %v169, 4294901760
    %v2510 = vsub.f32 %v169, %v2509
    %v2511 = vand.u32 %v2510, 4294901760
    %2512 = vmatpush.msra.mxu0 %v2511
    %v2513 = vand.u32 %v168, 4294901760
    %v2514 = vsub.f32 %v168, %v2513
    %v2515 = vand.u32 %v2514, 4294901760
    %2516 = vmatpush.msra.mxu0 %v2515
    %v2517 = vand.u32 %v167, 4294901760
    %v2518 = vsub.f32 %v167, %v2517
    %v2519 = vand.u32 %v2518, 4294901760
    %2520 = vmatpush.msra.mxu0 %v2519
    %v2521 = vand.u32 %v166, 4294901760
    %v2522 = vsub.f32 %v166, %v2521
    %v2523 = vand.u32 %v2522, 4294901760
    %2524 = vmatpush.msra.mxu0 %v2523
    %v2525 = vand.u32 %v165, 4294901760
    %v2526 = vsub.f32 %v165, %v2525
    %v2527 = vand.u32 %v2526, 4294901760
    %2528 = vmatpush.msra.mxu0 %v2527
    %v2529 = vand.u32 %v164, 4294901760
    %v2530 = vsub.f32 %v164, %v2529
    %v2531 = vand.u32 %v2530, 4294901760
    %2532 = vmatpush.msra.mxu0 %v2531
    %v2533 = vand.u32 %v163, 4294901760
    %v2534 = vsub.f32 %v163, %v2533
    %v2535 = vand.u32 %v2534, 4294901760
    %2536 = vmatpush.msra.mxu0 %v2535
    %v2537 = vand.u32 %v162, 4294901760
    %v2538 = vsub.f32 %v162, %v2537
    %v2539 = vand.u32 %v2538, 4294901760
    %2540 = vmatpush.msra.mxu0 %v2539
    %v2541 = vand.u32 %v64, 4294901760
    %2542 = vmatmul.f32.gmra.mxu0 %v2541
    %v2543 = vpop.f32.mrf.mxu0
    %v2544 = vadd.f32 %v2475, %v2543
    %2545 = vdwg.mxu0
    %v2546 = vand.u32 %v177, 4294901760
    %2547 = vmatpush.msra.mxu0 %v2546
    %v2548 = vand.u32 %v176, 4294901760
    %2549 = vmatpush.msra.mxu0 %v2548
    %v2550 = vand.u32 %v175, 4294901760
    %2551 = vmatpush.msra.mxu0 %v2550
    %v2552 = vand.u32 %v174, 4294901760
    %2553 = vmatpush.msra.mxu0 %v2552
    %v2554 = vand.u32 %v173, 4294901760
    %2555 = vmatpush.msra.mxu0 %v2554
    %v2556 = vand.u32 %v172, 4294901760
    %2557 = vmatpush.msra.mxu0 %v2556
    %v2558 = vand.u32 %v171, 4294901760
    %2559 = vmatpush.msra.mxu0 %v2558
    %v2560 = vand.u32 %v170, 4294901760
    %2561 = vmatpush.msra.mxu0 %v2560
    %v2562 = vand.u32 %v169, 4294901760
    %2563 = vmatpush.msra.mxu0 %v2562
    %v2564 = vand.u32 %v168, 4294901760
    %2565 = vmatpush.msra.mxu0 %v2564
    %v2566 = vand.u32 %v167, 4294901760
    %2567 = vmatpush.msra.mxu0 %v2566
    %v2568 = vand.u32 %v166, 4294901760
    %2569 = vmatpush.msra.mxu0 %v2568
    %v2570 = vand.u32 %v165, 4294901760
    %2571 = vmatpush.msra.mxu0 %v2570
    %v2572 = vand.u32 %v164, 4294901760
    %2573 = vmatpush.msra.mxu0 %v2572
    %v2574 = vand.u32 %v163, 4294901760
    %2575 = vmatpush.msra.mxu0 %v2574
    %v2576 = vand.u32 %v162, 4294901760
    %2577 = vmatpush.msra.mxu0 %v2576
    %v2578 = vand.u32 %v64, 4294901760
    %2579 = vmatmul.f32.gmra.mxu0 %v2578
    %v2580 = vpop.f32.mrf.mxu0
    %v2581 = vadd.f32 %v2544, %v2580
    %2582 = vdwg.mxu0
    %v2583 = vand.u32 %v193, 4294901760
    %2584 = vmatpush.msra.mxu0 %v2583
    %v2585 = vand.u32 %v192, 4294901760
    %2586 = vmatpush.msra.mxu0 %v2585
    %v2587 = vand.u32 %v191, 4294901760
    %2588 = vmatpush.msra.mxu0 %v2587
    %v2589 = vand.u32 %v190, 4294901760
    %2590 = vmatpush.msra.mxu0 %v2589
    %v2591 = vand.u32 %v189, 4294901760
    %2592 = vmatpush.msra.mxu0 %v2591
    %v2593 = vand.u32 %v188, 4294901760
    %2594 = vmatpush.msra.mxu0 %v2593
    %v2595 = vand.u32 %v187, 4294901760
    %2596 = vmatpush.msra.mxu0 %v2595
    %v2597 = vand.u32 %v186, 4294901760
    %2598 = vmatpush.msra.mxu0 %v2597
    %v2599 = vand.u32 %v185, 4294901760
    %2600 = vmatpush.msra.mxu0 %v2599
    %v2601 = vand.u32 %v184, 4294901760
    %2602 = vmatpush.msra.mxu0 %v2601
    %v2603 = vand.u32 %v183, 4294901760
    %2604 = vmatpush.msra.mxu0 %v2603
    %v2605 = vand.u32 %v182, 4294901760
    %2606 = vmatpush.msra.mxu0 %v2605
    %v2607 = vand.u32 %v181, 4294901760
    %2608 = vmatpush.msra.mxu0 %v2607
    %v2609 = vand.u32 %v180, 4294901760
    %2610 = vmatpush.msra.mxu0 %v2609
    %v2611 = vand.u32 %v179, 4294901760
    %2612 = vmatpush.msra.mxu0 %v2611
    %v2613 = vand.u32 %v178, 4294901760
    %2614 = vmatpush.msra.mxu0 %v2613
    %v2615 = vand.u32 %v65, 4294901760
    %v2616 = vsub.f32 %v65, %v2615
    %v2617 = vand.u32 %v2616, 4294901760
    %v2618 = vsub.f32 %v2616, %v2617
    %v2619 = vand.u32 %v2618, 4294901760
    %2620 = vmatmul.f32.gmra.mxu0 %v2619
    %v2621 = vpop.f32.mrf.mxu0
    %v2622 = vadd.f32 %v2581, %v2621
    %2623 = vdwg.mxu0
    %v2624 = vand.u32 %v193, 4294901760
    %v2625 = vsub.f32 %v193, %v2624
    %v2626 = vand.u32 %v2625, 4294901760
    %v2627 = vsub.f32 %v2625, %v2626
    %v2628 = vand.u32 %v2627, 4294901760
    %2629 = vmatpush.msra.mxu0 %v2628
    %v2630 = vand.u32 %v192, 4294901760
    %v2631 = vsub.f32 %v192, %v2630
    %v2632 = vand.u32 %v2631, 4294901760
    %v2633 = vsub.f32 %v2631, %v2632
    %v2634 = vand.u32 %v2633, 4294901760
    %2635 = vmatpush.msra.mxu0 %v2634
    %v2636 = vand.u32 %v191, 4294901760
    %v2637 = vsub.f32 %v191, %v2636
    %v2638 = vand.u32 %v2637, 4294901760
    %v2639 = vsub.f32 %v2637, %v2638
    %v2640 = vand.u32 %v2639, 4294901760
    %2641 = vmatpush.msra.mxu0 %v2640
    %v2642 = vand.u32 %v190, 4294901760
    %v2643 = vsub.f32 %v190, %v2642
    %v2644 = vand.u32 %v2643, 4294901760
    %v2645 = vsub.f32 %v2643, %v2644
    %v2646 = vand.u32 %v2645, 4294901760
    %2647 = vmatpush.msra.mxu0 %v2646
    %v2648 = vand.u32 %v189, 4294901760
    %v2649 = vsub.f32 %v189, %v2648
    %v2650 = vand.u32 %v2649, 4294901760
    %v2651 = vsub.f32 %v2649, %v2650
    %v2652 = vand.u32 %v2651, 4294901760
    %2653 = vmatpush.msra.mxu0 %v2652
    %v2654 = vand.u32 %v188, 4294901760
    %v2655 = vsub.f32 %v188, %v2654
    %v2656 = vand.u32 %v2655, 4294901760
    %v2657 = vsub.f32 %v2655, %v2656
    %v2658 = vand.u32 %v2657, 4294901760
    %2659 = vmatpush.msra.mxu0 %v2658
    %v2660 = vand.u32 %v187, 4294901760
    %v2661 = vsub.f32 %v187, %v2660
    %v2662 = vand.u32 %v2661, 4294901760
    %v2663 = vsub.f32 %v2661, %v2662
    %v2664 = vand.u32 %v2663, 4294901760
    %2665 = vmatpush.msra.mxu0 %v2664
    %v2666 = vand.u32 %v186, 4294901760
    %v2667 = vsub.f32 %v186, %v2666
    %v2668 = vand.u32 %v2667, 4294901760
    %v2669 = vsub.f32 %v2667, %v2668
    %v2670 = vand.u32 %v2669, 4294901760
    %2671 = vmatpush.msra.mxu0 %v2670
    %v2672 = vand.u32 %v185, 4294901760
    %v2673 = vsub.f32 %v185, %v2672
    %v2674 = vand.u32 %v2673, 4294901760
    %v2675 = vsub.f32 %v2673, %v2674
    %v2676 = vand.u32 %v2675, 4294901760
    %2677 = vmatpush.msra.mxu0 %v2676
    %v2678 = vand.u32 %v184, 4294901760
    %v2679 = vsub.f32 %v184, %v2678
    %v2680 = vand.u32 %v2679, 4294901760
    %v2681 = vsub.f32 %v2679, %v2680
    %v2682 = vand.u32 %v2681, 4294901760
    %2683 = vmatpush.msra.mxu0 %v2682
    %v2684 = vand.u32 %v183, 4294901760
    %v2685 = vsub.f32 %v183, %v2684
    %v2686 = vand.u32 %v2685, 4294901760
    %v2687 = vsub.f32 %v2685, %v2686
    %v2688 = vand.u32 %v2687, 4294901760
    %2689 = vmatpush.msra.mxu0 %v2688
    %v2690 = vand.u32 %v182, 4294901760
    %v2691 = vsub.f32 %v182, %v2690
    %v2692 = vand.u32 %v2691, 4294901760
    %v2693 = vsub.f32 %v2691, %v2692
    %v2694 = vand.u32 %v2693, 4294901760
    %2695 = vmatpush.msra.mxu0 %v2694
    %v2696 = vand.u32 %v181, 4294901760
    %v2697 = vsub.f32 %v181, %v2696
    %v2698 = vand.u32 %v2697, 4294901760
    %v2699 = vsub.f32 %v2697, %v2698
    %v2700 = vand.u32 %v2699, 4294901760
    %2701 = vmatpush.msra.mxu0 %v2700
    %v2702 = vand.u32 %v180, 4294901760
    %v2703 = vsub.f32 %v180, %v2702
    %v2704 = vand.u32 %v2703, 4294901760
    %v2705 = vsub.f32 %v2703, %v2704
    %v2706 = vand.u32 %v2705, 4294901760
    %2707 = vmatpush.msra.mxu0 %v2706
    %v2708 = vand.u32 %v179, 4294901760
    %v2709 = vsub.f32 %v179, %v2708
    %v2710 = vand.u32 %v2709, 4294901760
    %v2711 = vsub.f32 %v2709, %v2710
    %v2712 = vand.u32 %v2711, 4294901760
    %2713 = vmatpush.msra.mxu0 %v2712
    %v2714 = vand.u32 %v178, 4294901760
    %v2715 = vsub.f32 %v178, %v2714
    %v2716 = vand.u32 %v2715, 4294901760
    %v2717 = vsub.f32 %v2715, %v2716
    %v2718 = vand.u32 %v2717, 4294901760
    %2719 = vmatpush.msra.mxu0 %v2718
    %v2720 = vand.u32 %v65, 4294901760
    %2721 = vmatmul.f32.gmra.mxu0 %v2720
    %v2722 = vpop.f32.mrf.mxu0
    %v2723 = vadd.f32 %v2622, %v2722
    %2724 = vdwg.mxu0
    %v2725 = vand.u32 %v193, 4294901760
    %v2726 = vsub.f32 %v193, %v2725
    %2727 = vmatpush.msra.mxu0 %v2726
    %v2728 = vand.u32 %v192, 4294901760
    %v2729 = vsub.f32 %v192, %v2728
    %2730 = vmatpush.msra.mxu0 %v2729
    %v2731 = vand.u32 %v191, 4294901760
    %v2732 = vsub.f32 %v191, %v2731
    %2733 = vmatpush.msra.mxu0 %v2732
    %v2734 = vand.u32 %v190, 4294901760
    %v2735 = vsub.f32 %v190, %v2734
    %2736 = vmatpush.msra.mxu0 %v2735
    %v2737 = vand.u32 %v189, 4294901760
    %v2738 = vsub.f32 %v189, %v2737
    %2739 = vmatpush.msra.mxu0 %v2738
    %v2740 = vand.u32 %v188, 4294901760
    %v2741 = vsub.f32 %v188, %v2740
    %2742 = vmatpush.msra.mxu0 %v2741
    %v2743 = vand.u32 %v187, 4294901760
    %v2744 = vsub.f32 %v187, %v2743
    %2745 = vmatpush.msra.mxu0 %v2744
    %v2746 = vand.u32 %v186, 4294901760
    %v2747 = vsub.f32 %v186, %v2746
    %2748 = vmatpush.msra.mxu0 %v2747
    %v2749 = vand.u32 %v185, 4294901760
    %v2750 = vsub.f32 %v185, %v2749
    %2751 = vmatpush.msra.mxu0 %v2750
    %v2752 = vand.u32 %v184, 4294901760
    %v2753 = vsub.f32 %v184, %v2752
    %2754 = vmatpush.msra.mxu0 %v2753
    %v2755 = vand.u32 %v183, 4294901760
    %v2756 = vsub.f32 %v183, %v2755
    %2757 = vmatpush.msra.mxu0 %v2756
    %v2758 = vand.u32 %v182, 4294901760
    %v2759 = vsub.f32 %v182, %v2758
    %2760 = vmatpush.msra.mxu0 %v2759
    %v2761 = vand.u32 %v181, 4294901760
    %v2762 = vsub.f32 %v181, %v2761
    %2763 = vmatpush.msra.mxu0 %v2762
    %v2764 = vand.u32 %v180, 4294901760
    %v2765 = vsub.f32 %v180, %v2764
    %2766 = vmatpush.msra.mxu0 %v2765
    %v2767 = vand.u32 %v179, 4294901760
    %v2768 = vsub.f32 %v179, %v2767
    %2769 = vmatpush.msra.mxu0 %v2768
    %v2770 = vand.u32 %v178, 4294901760
    %v2771 = vsub.f32 %v178, %v2770
    %2772 = vmatpush.msra.mxu0 %v2771
    %v2773 = vand.u32 %v65, 4294901760
    %v2774 = vsub.f32 %v65, %v2773
    %2775 = vmatmul.f32.gmra.mxu0 %v2774
    %v2776 = vpop.f32.mrf.mxu0
    %v2777 = vadd.f32 %v2723, %v2776
    %2778 = vdwg.mxu0
    %v2779 = vand.u32 %v193, 4294901760
    %2780 = vmatpush.msra.mxu0 %v2779
    %v2781 = vand.u32 %v192, 4294901760
    %2782 = vmatpush.msra.mxu0 %v2781
    %v2783 = vand.u32 %v191, 4294901760
    %2784 = vmatpush.msra.mxu0 %v2783
    %v2785 = vand.u32 %v190, 4294901760
    %2786 = vmatpush.msra.mxu0 %v2785
    %v2787 = vand.u32 %v189, 4294901760
    %2788 = vmatpush.msra.mxu0 %v2787
    %v2789 = vand.u32 %v188, 4294901760
    %2790 = vmatpush.msra.mxu0 %v2789
    %v2791 = vand.u32 %v187, 4294901760
    %2792 = vmatpush.msra.mxu0 %v2791
    %v2793 = vand.u32 %v186, 4294901760
    %2794 = vmatpush.msra.mxu0 %v2793
    %v2795 = vand.u32 %v185, 4294901760
    %2796 = vmatpush.msra.mxu0 %v2795
    %v2797 = vand.u32 %v184, 4294901760
    %2798 = vmatpush.msra.mxu0 %v2797
    %v2799 = vand.u32 %v183, 4294901760
    %2800 = vmatpush.msra.mxu0 %v2799
    %v2801 = vand.u32 %v182, 4294901760
    %2802 = vmatpush.msra.mxu0 %v2801
    %v2803 = vand.u32 %v181, 4294901760
    %2804 = vmatpush.msra.mxu0 %v2803
    %v2805 = vand.u32 %v180, 4294901760
    %2806 = vmatpush.msra.mxu0 %v2805
    %v2807 = vand.u32 %v179, 4294901760
    %2808 = vmatpush.msra.mxu0 %v2807
    %v2809 = vand.u32 %v178, 4294901760
    %2810 = vmatpush.msra.mxu0 %v2809
    %v2811 = vand.u32 %v65, 4294901760
    %v2812 = vsub.f32 %v65, %v2811
    %v2813 = vand.u32 %v2812, 4294901760
    %2814 = vmatmul.f32.gmra.mxu0 %v2813
    %v2815 = vpop.f32.mrf.mxu0
    %v2816 = vadd.f32 %v2777, %v2815
    %2817 = vdwg.mxu0
    %v2818 = vand.u32 %v193, 4294901760
    %v2819 = vsub.f32 %v193, %v2818
    %v2820 = vand.u32 %v2819, 4294901760
    %2821 = vmatpush.msra.mxu0 %v2820
    %v2822 = vand.u32 %v192, 4294901760
    %v2823 = vsub.f32 %v192, %v2822
    %v2824 = vand.u32 %v2823, 4294901760
    %2825 = vmatpush.msra.mxu0 %v2824
    %v2826 = vand.u32 %v191, 4294901760
    %v2827 = vsub.f32 %v191, %v2826
    %v2828 = vand.u32 %v2827, 4294901760
    %2829 = vmatpush.msra.mxu0 %v2828
    %v2830 = vand.u32 %v190, 4294901760
    %v2831 = vsub.f32 %v190, %v2830
    %v2832 = vand.u32 %v2831, 4294901760
    %2833 = vmatpush.msra.mxu0 %v2832
    %v2834 = vand.u32 %v189, 4294901760
    %v2835 = vsub.f32 %v189, %v2834
    %v2836 = vand.u32 %v2835, 4294901760
    %2837 = vmatpush.msra.mxu0 %v2836
    %v2838 = vand.u32 %v188, 4294901760
    %v2839 = vsub.f32 %v188, %v2838
    %v2840 = vand.u32 %v2839, 4294901760
    %2841 = vmatpush.msra.mxu0 %v2840
    %v2842 = vand.u32 %v187, 4294901760
    %v2843 = vsub.f32 %v187, %v2842
    %v2844 = vand.u32 %v2843, 4294901760
    %2845 = vmatpush.msra.mxu0 %v2844
    %v2846 = vand.u32 %v186, 4294901760
    %v2847 = vsub.f32 %v186, %v2846
    %v2848 = vand.u32 %v2847, 4294901760
    %2849 = vmatpush.msra.mxu0 %v2848
    %v2850 = vand.u32 %v185, 4294901760
    %v2851 = vsub.f32 %v185, %v2850
    %v2852 = vand.u32 %v2851, 4294901760
    %2853 = vmatpush.msra.mxu0 %v2852
    %v2854 = vand.u32 %v184, 4294901760
    %v2855 = vsub.f32 %v184, %v2854
    %v2856 = vand.u32 %v2855, 4294901760
    %2857 = vmatpush.msra.mxu0 %v2856
    %v2858 = vand.u32 %v183, 4294901760
    %v2859 = vsub.f32 %v183, %v2858
    %v2860 = vand.u32 %v2859, 4294901760
    %2861 = vmatpush.msra.mxu0 %v2860
    %v2862 = vand.u32 %v182, 4294901760
    %v2863 = vsub.f32 %v182, %v2862
    %v2864 = vand.u32 %v2863, 4294901760
    %2865 = vmatpush.msra.mxu0 %v2864
    %v2866 = vand.u32 %v181, 4294901760
    %v2867 = vsub.f32 %v181, %v2866
    %v2868 = vand.u32 %v2867, 4294901760
    %2869 = vmatpush.msra.mxu0 %v2868
    %v2870 = vand.u32 %v180, 4294901760
    %v2871 = vsub.f32 %v180, %v2870
    %v2872 = vand.u32 %v2871, 4294901760
    %2873 = vmatpush.msra.mxu0 %v2872
    %v2874 = vand.u32 %v179, 4294901760
    %v2875 = vsub.f32 %v179, %v2874
    %v2876 = vand.u32 %v2875, 4294901760
    %2877 = vmatpush.msra.mxu0 %v2876
    %v2878 = vand.u32 %v178, 4294901760
    %v2879 = vsub.f32 %v178, %v2878
    %v2880 = vand.u32 %v2879, 4294901760
    %2881 = vmatpush.msra.mxu0 %v2880
    %v2882 = vand.u32 %v65, 4294901760
    %2883 = vmatmul.f32.gmra.mxu0 %v2882
    %v2884 = vpop.f32.mrf.mxu0
    %v2885 = vadd.f32 %v2816, %v2884
    %2886 = vdwg.mxu0
    %v2887 = vand.u32 %v193, 4294901760
    %2888 = vmatpush.msra.mxu0 %v2887
    %v2889 = vand.u32 %v192, 4294901760
    %2890 = vmatpush.msra.mxu0 %v2889
    %v2891 = vand.u32 %v191, 4294901760
    %2892 = vmatpush.msra.mxu0 %v2891
    %v2893 = vand.u32 %v190, 4294901760
    %2894 = vmatpush.msra.mxu0 %v2893
    %v2895 = vand.u32 %v189, 4294901760
    %2896 = vmatpush.msra.mxu0 %v2895
    %v2897 = vand.u32 %v188, 4294901760
    %2898 = vmatpush.msra.mxu0 %v2897
    %v2899 = vand.u32 %v187, 4294901760
    %2900 = vmatpush.msra.mxu0 %v2899
    %v2901 = vand.u32 %v186, 4294901760
    %2902 = vmatpush.msra.mxu0 %v2901
    %v2903 = vand.u32 %v185, 4294901760
    %2904 = vmatpush.msra.mxu0 %v2903
    %v2905 = vand.u32 %v184, 4294901760
    %2906 = vmatpush.msra.mxu0 %v2905
    %v2907 = vand.u32 %v183, 4294901760
    %2908 = vmatpush.msra.mxu0 %v2907
    %v2909 = vand.u32 %v182, 4294901760
    %2910 = vmatpush.msra.mxu0 %v2909
    %v2911 = vand.u32 %v181, 4294901760
    %2912 = vmatpush.msra.mxu0 %v2911
    %v2913 = vand.u32 %v180, 4294901760
    %2914 = vmatpush.msra.mxu0 %v2913
    %v2915 = vand.u32 %v179, 4294901760
    %2916 = vmatpush.msra.mxu0 %v2915
    %v2917 = vand.u32 %v178, 4294901760
    %2918 = vmatpush.msra.mxu0 %v2917
    %v2919 = vand.u32 %v65, 4294901760
    %2920 = vmatmul.f32.gmra.mxu0 %v2919
    %v2921 = vpop.f32.mrf.mxu0
    %v2922 = vadd.f32 %v2885, %v2921
    %2923 = vdwg.mxu0
    %2924 = vst [vmem:[#allocation8] sm:$0xff] %v2922
    // Predicated region
    $region26: #{tpu_custom_call.1} parent=1 // pred_check
      _
    $region27: #{tpu_custom_call.1} parent=1 // pred_check_branch
      %2926 = sbr.rel (0) target = $region29
    $region28: #{tpu_custom_call.1} parent=1 // pred_region
      %2928 = vsyncadd [#allocation4], 0
      %s2930 = sshll.u32 [#allocation8], 4
      %s2931 = int_to_ptr.vmem [resolvable:$true] %s2930
      %s2932 = sshll.u32 %s3, 4
      %s2933 = int_to_ptr.hbm [resolvable:$true] %s2932
      %2935 = dma.vmem_to_hbm [thread:$0]  %s2931, 128, %s2933, [#allocation4]
    $region29: #{tpu_custom_call.1} parent=1 // pred_fallthru
      _
    // Predicated region
    $region30: #{tpu_custom_call.1} parent=1 // pred_check
      _
    $region31: #{tpu_custom_call.1} parent=1 // pred_check_branch
      %2937 = sbr.rel (0) target = $region33
    $region32: #{tpu_custom_call.1} parent=1 // pred_region
      %2939 = dma.done [#allocation4], 128
    $region33: #{tpu_custom_call.1} parent=1 // pred_fallthru
      _
    %2940 = vsyncpa [#allocation3], 1
    %2941 = vsyncpa [#allocation6], 1
    %2942 = vsyncpa [#allocation4], 1

</llo_original>
